<compile_context>
chip_gen: v7x
topology: tpu7x:2x2x1
jax: 0.10.0
libtpu: 0.0.40
codegen_flags: <defaults>
</compile_context>

<pallas_src>
import functools

import jax
import jax.numpy as jnp
import numpy as np
from jax.experimental import pallas as pl
from jax.experimental.pallas import tpu as pltpu


def fused_graphsage_kernel(adj_ref, feat_ref, w1_ref, b1_ref, w2_ref, b2_ref,
                           out_ref, h_scratch, *, tm: int):
    """Fused 2-layer GraphSAGE forward for one tile of output rows.

    adj_ref   : (N, N)        bf16, VMEM resident (full adjacency)
    feat_ref  : (N, Fin)      bf16, VMEM resident (all node features)
    w1_ref    : (2*Fin, H)    bf16  (= conv1.weight.T, [self | neigh] order)
    b1_ref    : (1, H)        f32
    w2_ref    : (2*H, Opad)   bf16  (= conv2.weight.T zero-padded to Opad lanes)
    b2_ref    : (1, Opad)     f32   (zero-padded)
    out_ref   : (tm, Opad)    f32   output tile
    h_scratch : (N, H)        f32   VMEM scratch for the layer-1 activations
    """
    i = pl.program_id(0)
    row0 = pl.multiple_of(i * tm, tm)

    adj = adj_ref[...]                                     # (N, N)   bf16
    feat = feat_ref[...]                                   # (N, Fin) bf16

    # ---- Layer 1 for ALL nodes (layer-2 aggregation needs every node's h) ----
    neigh1 = jnp.dot(adj, feat, preferred_element_type=jnp.float32)   # (N, Fin)
    hcat1 = jnp.concatenate([feat.astype(jnp.float32), neigh1],
                            axis=1).astype(jnp.bfloat16)              # (N, 2*Fin)
    h = jnp.dot(hcat1, w1_ref[...], preferred_element_type=jnp.float32)
    h = jnp.maximum(h + b1_ref[...], 0.0)                             # (N, H) f32
    # dropout: identity in eval mode
    h_scratch[...] = h

    # ---- Layer 2 for this tile of rows only ----
    adj_tile = adj_ref[pl.ds(row0, tm), :]                             # (tm, N) bf16
    neigh2 = jnp.dot(adj_tile, h.astype(jnp.bfloat16),
                     preferred_element_type=jnp.float32)               # (tm, H)
    h_tile = h_scratch[pl.ds(row0, tm), :]                             # (tm, H)
    hcat2 = jnp.concatenate([h_tile, neigh2], axis=1).astype(jnp.bfloat16)
    out = jnp.dot(hcat2, w2_ref[...],
                  preferred_element_type=jnp.float32) + b2_ref[...]    # (tm, Opad)
    out_ref[...] = out.astype(out_ref.dtype)


def graphsage_forward(adj, features, params, *, tm=128):
    """Full GraphSAGE forward (eval mode) in one fused pallas_call."""
    w1, b1, w2, b2 = params["w1"], params["b1"], params["w2"], params["b2"]
    N, Fin = features.shape
    H = w1.shape[0]
    O = w2.shape[0]
    assert w1.shape[1] == 2 * Fin and w2.shape[1] == 2 * H

    tm = min(tm, N)
    assert N % tm == 0, "number of nodes must be divisible by the row tile"

    # Lane-dense padded output width (multiple of 128).
    O_pad = max(128, ((O + 127) // 128) * 128)

    # Weight prep: pre-transpose (so kernel does x_cat @ W.T as a plain matmul),
    # pad conv2 output dim to O_pad, cast MXU operands to bf16.
    w1_t = w1.T.astype(jnp.bfloat16)                         # (2*Fin, H)
    w2_pad = jnp.zeros((2 * H, O_pad), jnp.float32)
    w2_pad = w2_pad.at[:, :O].set(w2.T).astype(jnp.bfloat16)  # (2*H, O_pad)
    b1_2d = b1.reshape(1, H).astype(jnp.float32)
    b2_pad = jnp.zeros((1, O_pad), jnp.float32).at[:, :O].set(b2.reshape(1, O))

    adj_bf = adj.astype(jnp.bfloat16)
    feat_bf = features.astype(jnp.bfloat16)

    kernel = functools.partial(fused_graphsage_kernel, tm=tm)

    vmem_resident = pl.BlockSpec(memory_space=pltpu.MemorySpace.VMEM)
    grid_spec = pltpu.PrefetchScalarGridSpec(
        num_scalar_prefetch=0,
        grid=(N // tm,),
        in_specs=[
            vmem_resident,   # adj      (full, single-buffered)
            vmem_resident,   # features (full, single-buffered)
            vmem_resident,   # w1.T
            vmem_resident,   # b1
            vmem_resident,   # w2.T (padded)
            vmem_resident,   # b2  (padded)
        ],
        out_specs=pl.BlockSpec((tm, O_pad), lambda i: (i, 0)),
        scratch_shapes=[pltpu.VMEM((N, H), jnp.float32)],
    )

    out_padded = pl.pallas_call(
        kernel,
        out_shape=jax.ShapeDtypeStruct((N, O_pad), jnp.float32),
        grid_spec=grid_spec,
        compiler_params=pltpu.CompilerParams(
            dimension_semantics=("parallel",),
            vmem_limit_bytes=64 * 1024 * 1024,
        ),
    )(adj_bf, feat_bf, w1_t, b1_2d, w2_pad, b2_pad)

    return out_padded[:, :O]


def reference_forward(adj, features, params):
    """Pure-JAX f32 reference mirroring the PyTorch forward exactly."""
    w1, b1, w2, b2 = params["w1"], params["b1"], params["w2"], params["b2"]
    neigh = adj @ features
    h = jnp.concatenate([features, neigh], axis=1)
    h = jnp.maximum(h @ w1.T + b1, 0.0)
    neigh = adj @ h
    h = jnp.concatenate([h, neigh], axis=1)
    return h @ w2.T + b2


if __name__ == "__main__":
    N = 256            # number of nodes
    IN_F = 32          # in_features
    HID = 64           # hidden_features
    OUT = 16           # out_features (classes)

    key = jax.random.PRNGKey(0)
    k_adj, k_feat, k_w1, k_b1, k_w2, k_b2 = jax.random.split(key, 6)

    # Random sparse-ish adjacency, row-normalized ("mean" aggregation).
    raw = (jax.random.uniform(k_adj, (N, N)) < 0.1).astype(jnp.float32)
    raw = raw + jnp.eye(N, dtype=jnp.float32)  # ensure no empty rows
    adj = raw / jnp.sum(raw, axis=1, keepdims=True)

    features = jax.random.normal(k_feat, (N, IN_F), dtype=jnp.float32)

    # Deterministic parameter init (nn.Linear-style uniform fan-in scaling).
    def linear_init(kw, kb, out_dim, in_dim):
        bound = 1.0 / np.sqrt(in_dim)
        w = jax.random.uniform(kw, (out_dim, in_dim), jnp.float32, -bound, bound)
        b = jax.random.uniform(kb, (out_dim,), jnp.float32, -bound, bound)
        return w, b

    w1, b1 = linear_init(k_w1, k_b1, HID, IN_F * 2)   # conv1: Linear(2*in, hid)
    w2, b2 = linear_init(k_w2, k_b2, OUT, HID * 2)    # conv2: Linear(2*hid, out)
    params = {"w1": w1, "b1": b1, "w2": w2, "b2": b2}

    out = graphsage_forward(adj, features, params)
    out = jax.block_until_ready(out)

    ref = reference_forward(adj, features, params)
    assert out.shape == (N, OUT)
    # Tolerance loosened vs. the pure-f32 version: MXU operands are fed in
    # bf16 (f32 accumulation), which bounds elementwise error well below 3e-2.
    np.testing.assert_allclose(np.asarray(out), np.asarray(ref),
                               rtol=3e-2, atol=3e-2)
    print("KERNEL_OK")
</pallas_src>

<mosaic_0001>
module attributes {stable_mosaic.version = 11 : i64} {
  func.func @fused_graphsage_kernel(%arg0: i32, %arg1: memref<256x256xbf16, #tpu.memory_space<vmem>>, %arg2: memref<256x32xbf16, #tpu.memory_space<vmem>>, %arg3: memref<64x64xbf16, #tpu.memory_space<vmem>>, %arg4: memref<1x64xf32, #tpu.memory_space<vmem>>, %arg5: memref<128x128xbf16, #tpu.memory_space<vmem>>, %arg6: memref<1x128xf32, #tpu.memory_space<vmem>>, %arg7: memref<128x128xf32, #tpu.memory_space<vmem>>, %arg8: memref<256x64xf32, #tpu.memory_space<vmem>>) attributes {dimension_semantics = [#tpu.dimension_semantics<parallel>], iteration_bounds = array<i64: 2>, scalar_prefetch = 0 : i64, scratch_operands = 1 : i64, tpu.core_type = #tpu.core_type<tc>, window_params = [{pipeline_mode = #tpu.pipeline_mode<synchronous>, transform_indices = @transform_0, window_bounds = array<i64: 256, 256>}, {pipeline_mode = #tpu.pipeline_mode<synchronous>, transform_indices = @transform_1, window_bounds = array<i64: 256, 32>}, {pipeline_mode = #tpu.pipeline_mode<synchronous>, transform_indices = @transform_2, window_bounds = array<i64: 64, 64>}, {pipeline_mode = #tpu.pipeline_mode<synchronous>, transform_indices = @transform_3, window_bounds = array<i64: 1, 64>}, {pipeline_mode = #tpu.pipeline_mode<synchronous>, transform_indices = @transform_4, window_bounds = array<i64: 128, 128>}, {pipeline_mode = #tpu.pipeline_mode<synchronous>, transform_indices = @transform_5, window_bounds = array<i64: 1, 128>}, {transform_indices = @transform_6, window_bounds = array<i64: 128, 128>}]} {
    %c128_i32 = arith.constant 128 : i32
    %0 = arith.muli %arg0, %c128_i32 : i32
    %1 = tpu.assume_multiple %0, 128 : i32
    %c0 = arith.constant 0 : index
    %c0_0 = arith.constant 0 : index
    %2 = vector.load %arg1[%c0, %c0_0] : memref<256x256xbf16, #tpu.memory_space<vmem>>, vector<256x256xbf16>
    %c0_1 = arith.constant 0 : index
    %c0_2 = arith.constant 0 : index
    %3 = vector.load %arg2[%c0_1, %c0_2] : memref<256x32xbf16, #tpu.memory_space<vmem>>, vector<256x32xbf16>
    %cst = arith.constant dense<0.000000e+00> : vector<256x32xf32>
    %4 = tpu.matmul %2, %3, %cst {dimension_numbers = #tpu.dot_dimension_numbers<[1], [0], [0], [1], [0, 0, 1, 1], [], []>} : vector<256x256xbf16>, vector<256x32xbf16>, vector<256x32xf32> -> vector<256x32xf32>
    %5 = arith.extf %3 : vector<256x32xbf16> to vector<256x32xf32>
    %6 = tpu.concatenate %5, %4 in 1 : vector<256x32xf32>, vector<256x32xf32> -> vector<256x64xf32>
    %7 = arith.truncf %6 : vector<256x64xf32> to vector<256x64xbf16>
    %c0_3 = arith.constant 0 : index
    %c0_4 = arith.constant 0 : index
    %8 = vector.load %arg3[%c0_3, %c0_4] : memref<64x64xbf16, #tpu.memory_space<vmem>>, vector<64x64xbf16>
    %cst_5 = arith.constant dense<0.000000e+00> : vector<256x64xf32>
    %9 = tpu.matmul %7, %8, %cst_5 {dimension_numbers = #tpu.dot_dimension_numbers<[1], [0], [0], [1], [0, 0, 1, 1], [], []>} : vector<256x64xbf16>, vector<64x64xbf16>, vector<256x64xf32> -> vector<256x64xf32>
    %c0_6 = arith.constant 0 : index
    %c0_7 = arith.constant 0 : index
    %10 = vector.load %arg4[%c0_6, %c0_7] : memref<1x64xf32, #tpu.memory_space<vmem>>, vector<1x64xf32>
    %11 = vector.broadcast %10 : vector<1x64xf32> to vector<256x64xf32>
    %12 = arith.addf %9, %11 : vector<256x64xf32>
    %cst_8 = arith.constant 0.000000e+00 : f32
    %13 = vector.broadcast %cst_8 : f32 to vector<256x64xf32>
    %14 = arith.maximumf %12, %13 : vector<256x64xf32>
    %c0_9 = arith.constant 0 : index
    %c0_10 = arith.constant 0 : index
    %15 = vector.load %arg8[%c0_9, %c0_10] : memref<256x64xf32, #tpu.memory_space<vmem>>, vector<256x64xf32>
    tpu.vector_store %arg8[%c0_9, %c0_10], %14 {strides = array<i32>} : memref<256x64xf32, #tpu.memory_space<vmem>>, vector<256x64xf32>,
    %16 = arith.index_cast %1 : i32 to index
    %c0_11 = arith.constant 0 : index
    %17 = vector.load %arg1[%16, %c0_11] : memref<256x256xbf16, #tpu.memory_space<vmem>>, vector<128x256xbf16>
    %18 = arith.truncf %14 : vector<256x64xf32> to vector<256x64xbf16>
    %cst_12 = arith.constant dense<0.000000e+00> : vector<128x64xf32>
    %19 = tpu.matmul %17, %18, %cst_12 {dimension_numbers = #tpu.dot_dimension_numbers<[1], [0], [0], [1], [0, 0, 1, 1], [], []>} : vector<128x256xbf16>, vector<256x64xbf16>, vector<128x64xf32> -> vector<128x64xf32>
    %20 = arith.index_cast %1 : i32 to index
    %c0_13 = arith.constant 0 : index
    %21 = vector.load %arg8[%20, %c0_13] : memref<256x64xf32, #tpu.memory_space<vmem>>, vector<128x64xf32>
    %22 = tpu.concatenate %21, %19 in 1 : vector<128x64xf32>, vector<128x64xf32> -> vector<128x128xf32>
    %23 = arith.truncf %22 : vector<128x128xf32> to vector<128x128xbf16>
    %c0_14 = arith.constant 0 : index
    %c0_15 = arith.constant 0 : index
    %24 = vector.load %arg5[%c0_14, %c0_15] : memref<128x128xbf16, #tpu.memory_space<vmem>>, vector<128x128xbf16>
    %cst_16 = arith.constant dense<0.000000e+00> : vector<128x128xf32>
    %25 = tpu.matmul %23, %24, %cst_16 {dimension_numbers = #tpu.dot_dimension_numbers<[1], [0], [0], [1], [0, 0, 1, 1], [], []>} : vector<128x128xbf16>, vector<128x128xbf16>, vector<128x128xf32> -> vector<128x128xf32>
    %c0_17 = arith.constant 0 : index
    %c0_18 = arith.constant 0 : index
    %26 = vector.load %arg6[%c0_17, %c0_18] : memref<1x128xf32, #tpu.memory_space<vmem>>, vector<1x128xf32>
    %27 = vector.broadcast %26 : vector<1x128xf32> to vector<128x128xf32>
    %28 = arith.addf %25, %27 : vector<128x128xf32>
    %c0_19 = arith.constant 0 : index
    %c0_20 = arith.constant 0 : index
    %29 = vector.load %arg7[%c0_19, %c0_20] : memref<128x128xf32, #tpu.memory_space<vmem>>, vector<128x128xf32>
    tpu.vector_store %arg7[%c0_19, %c0_20], %28 {strides = array<i32>} : memref<128x128xf32, #tpu.memory_space<vmem>>, vector<128x128xf32>,
    return
  }
  func.func @transform_0(%arg0: i32) -> (i32, i32) {
    %c0_i32 = arith.constant 0 : i32
    %c0_i32_0 = arith.constant 0 : i32
    %c0_i32_1 = arith.constant 0 : i32
    return %c0_i32, %c0_i32_0 : i32, i32
  }
  func.func @transform_1(%arg0: i32) -> (i32, i32) {
    %c0_i32 = arith.constant 0 : i32
    %c0_i32_0 = arith.constant 0 : i32
    %c0_i32_1 = arith.constant 0 : i32
    return %c0_i32, %c0_i32_0 : i32, i32
  }
  func.func @transform_2(%arg0: i32) -> (i32, i32) {
    %c0_i32 = arith.constant 0 : i32
    %c0_i32_0 = arith.constant 0 : i32
    %c0_i32_1 = arith.constant 0 : i32
    return %c0_i32, %c0_i32_0 : i32, i32
  }
  func.func @transform_3(%arg0: i32) -> (i32, i32) {
    %c0_i32 = arith.constant 0 : i32
    %c0_i32_0 = arith.constant 0 : i32
    %c0_i32_1 = arith.constant 0 : i32
    return %c0_i32, %c0_i32_0 : i32, i32
  }
  func.func @transform_4(%arg0: i32) -> (i32, i32) {
    %c0_i32 = arith.constant 0 : i32
    %c0_i32_0 = arith.constant 0 : i32
    %c0_i32_1 = arith.constant 0 : i32
    return %c0_i32, %c0_i32_0 : i32, i32
  }
  func.func @transform_5(%arg0: i32) -> (i32, i32) {
    %c0_i32 = arith.constant 0 : i32
    %c0_i32_0 = arith.constant 0 : i32
    %c0_i32_1 = arith.constant 0 : i32
    return %c0_i32, %c0_i32_0 : i32, i32
  }
  func.func @transform_6(%arg0: i32) -> (i32, i32) {
    %c0_i32 = arith.constant 0 : i32
    %c0_i32_0 = arith.constant 0 : i32
    return %arg0, %c0_i32 : i32, i32
  }
}

</mosaic_0001>

<llo_original>
// kernel: tpu_custom_call.1
$region0: #{tpu_custom_call.1}
  #allocation0 [shape = 'u32[]', space=smem, size = 0x4, offset = 0x4, fixed_abs, tag = 'smem constant byte address 0x4 - core index']
  #allocation1 [shape = 'u32[144,128]{1,0:T(1,128)}', space=vmem, size = 0x12000, scoped, tag = 'internal scratch']
  #allocation2 [shape = 'f32[256,64]{1,0:T(8,128)}', space=vmem, size = 0x20000, scoped, tag = 'scratch operand']
  %s0 = inlined_call_operand.hbm [shape: bf16[256,256], index: 0, kind: input, shape index: {}]
  %s1 = inlined_call_operand.hbm [shape: bf16[256,32], index: 1, kind: input, shape index: {}]
  %s2 = inlined_call_operand.hbm [shape: bf16[64,64], index: 2, kind: input, shape index: {}]
  %s3 = inlined_call_operand.hbm [shape: f32[1,64], index: 3, kind: input, shape index: {}]
  %s4 = inlined_call_operand.hbm [shape: bf16[128,128], index: 4, kind: input, shape index: {}]
  %s5 = inlined_call_operand.hbm [shape: f32[1,128], index: 5, kind: input, shape index: {}]
  %s6 = inlined_call_operand.hbm [shape: f32[256,128], index: 6, kind: output, shape index: {}]
  %s7 = sld [smem:[#allocation0]]
  $region81: #{tpu_custom_call.1} parent=0
    _
  %s9 = ssub.s32 1, %s7
  %s10 = scalar_select 0, %s9, %s7
  $region1: #{tpu_custom_call.1} parent=0
    #allocation3 [shape = 'u8[131072]{0}', space=vmem, size = 0x20000, scoped, tag = 'input window, operand 0, single buffered']
    #allocation4 [shape = 's32[2]{0}', space=sflag, size = 0x8, scoped, tag = 'scoped memory for tpu_custom_call.1']
    #allocation5 [shape = 's32[2]{0}', space=sflag, size = 0x8, scoped, tag = 'scoped memory for tpu_custom_call.1']
    #allocation6 [shape = 'u8[65536]{0}', space=vmem, size = 0x10000, scoped, tag = 'input window, operand 1, single buffered']
    #allocation7 [shape = 's32[1]{0}', space=sflag, size = 0x4, scoped, tag = 'scoped memory for tpu_custom_call.1']
    #allocation8 [shape = 'u8[16384]{0}', space=vmem, size = 0x4000, scoped, tag = 'input window, operand 2, single buffered']
    #allocation9 [shape = 'u8[512]{0}', space=vmem, size = 0x400, scoped, tag = 'input window, operand 3, single buffered']
    #allocation10 [shape = 's32[1]{0}', space=sflag, size = 0x4, scoped, tag = 'scoped memory for tpu_custom_call.1']
    #allocation11 [shape = 'u8[32768]{0}', space=vmem, size = 0x8000, scoped, tag = 'input window, operand 4, single buffered']
    #allocation12 [shape = 'u8[512]{0}', space=vmem, size = 0x400, scoped, tag = 'input window, operand 5, single buffered']
    #allocation13 [shape = 's32[1]{0}', space=sflag, size = 0x4, scoped, tag = 'scoped memory for tpu_custom_call.1']
    #allocation14 [shape = 'u8[131072]{0}', space=vmem, size = 0x20000, scoped, tag = 'output window, operand 0']
    %11 = vsyncpa [#allocation4], 0
    %12 = vsyncpa [#allocation7], 0
    %13 = vsyncpa [#allocation10], 0
    %14 = vsyncpa [#allocation13], 0
    %15 = vsyncpa [#allocation5], 0
    %s16 = scalar_lea.sflag [#allocation5], 1
    %17 = vsyncpa %s16, 0
    loop: start=0, step=1, limit=4
    $region2: #{tpu_custom_call.1} parent=1 // loop_pre_header
      _
    $region3: #{tpu_custom_call.1} parent=1 // loop_header
      %s19 = sphi 0, %s23
      %p20 = scmp.ge.s32.totalorder %s19, 4
      %s27 = sphi 0, %s27
      %s29 = sphi 0, %s27
      %s30 = sphi 0, %s29
      %s44 = sphi 0, %s30
      %s48 = sphi 0, %s48
      %s50 = sphi 0, %s48
      %s51 = sphi 0, %s50
      %s65 = sphi 0, %s51
      %s69 = sphi 0, %s69
      %s71 = sphi 0, %s69
      %s72 = sphi 0, %s71
      %s86 = sphi 0, %s72
      %s90 = sphi 0, %s90
      %s92 = sphi 0, %s90
      %s93 = sphi 0, %s92
      %s107 = sphi 0, %s93
      %s111 = sphi 0, %s111
      %s113 = sphi 0, %s111
      %s114 = sphi 0, %s113
      %s128 = sphi 0, %s114
      %s132 = sphi 0, %s132
      %s134 = sphi 0, %s132
      %s135 = sphi 0, %s134
      %s149 = sphi 0, %s135
      %s155 = sphi 0, %s157
      %s158 = sphi 0, %s155
      %s159 = sphi 0, %s158
      %s175 = sphi 0, %s159
    $region4: #{tpu_custom_call.1} parent=1 // loop_header_branch
      %22 = sbr.rel (%p20) target = $region8
    $region5: #{tpu_custom_call.1} parent=1 // loop_body
      %s24 = ssub.s32 %s19, 1
      %s25 = ssub.s32 %s19, 2
      %s26 = sadd.s32 %s19, 1
      %s28 = sadd.s32 %s27, 1
      %p31 = scmp.eq.s32.totalorder %s19, 1
      %p32 = scmp.ne.s32.totalorder %s27, %s29
      %p33 = scmp.eq.s32.totalorder %s19, 0
      %p34 = por %p32, %p33
      %p35 = scmp.ne.s32.totalorder %s27, %s29
      %p36 = scmp.eq.s32.totalorder %s24, 1
      %p37 = por %p35, %p36
      %p38 = scmp.ne.s32.totalorder %s29, %s30
      %p39 = scmp.eq.s32.totalorder %s24, 0
      %p40 = por %p38, %p39
      %p41 = scmp.ne.s32.totalorder %s29, %s30
      %p42 = scmp.eq.s32.totalorder %s25, 1
      %p43 = por %p41, %p42
      %p45 = scmp.ne.s32.totalorder %s30, %s44
      %p46 = scmp.eq.s32.totalorder %s25, 0
      %p47 = por %p45, %p46
      %s49 = sadd.s32 %s48, 1
      %p52 = scmp.eq.s32.totalorder %s19, 1
      %p53 = scmp.ne.s32.totalorder %s48, %s50
      %p54 = scmp.eq.s32.totalorder %s19, 0
      %p55 = por %p53, %p54
      %p56 = scmp.ne.s32.totalorder %s48, %s50
      %p57 = scmp.eq.s32.totalorder %s24, 1
      %p58 = por %p56, %p57
      %p59 = scmp.ne.s32.totalorder %s50, %s51
      %p60 = scmp.eq.s32.totalorder %s24, 0
      %p61 = por %p59, %p60
      %p62 = scmp.ne.s32.totalorder %s50, %s51
      %p63 = scmp.eq.s32.totalorder %s25, 1
      %p64 = por %p62, %p63
      %p66 = scmp.ne.s32.totalorder %s51, %s65
      %p67 = scmp.eq.s32.totalorder %s25, 0
      %p68 = por %p66, %p67
      %s70 = sadd.s32 %s69, 1
      %p73 = scmp.eq.s32.totalorder %s19, 1
      %p74 = scmp.ne.s32.totalorder %s69, %s71
      %p75 = scmp.eq.s32.totalorder %s19, 0
      %p76 = por %p74, %p75
      %p77 = scmp.ne.s32.totalorder %s69, %s71
      %p78 = scmp.eq.s32.totalorder %s24, 1
      %p79 = por %p77, %p78
      %p80 = scmp.ne.s32.totalorder %s71, %s72
      %p81 = scmp.eq.s32.totalorder %s24, 0
      %p82 = por %p80, %p81
      %p83 = scmp.ne.s32.totalorder %s71, %s72
      %p84 = scmp.eq.s32.totalorder %s25, 1
      %p85 = por %p83, %p84
      %p87 = scmp.ne.s32.totalorder %s72, %s86
      %p88 = scmp.eq.s32.totalorder %s25, 0
      %p89 = por %p87, %p88
      %s91 = sadd.s32 %s90, 1
      %p94 = scmp.eq.s32.totalorder %s19, 1
      %p95 = scmp.ne.s32.totalorder %s90, %s92
      %p96 = scmp.eq.s32.totalorder %s19, 0
      %p97 = por %p95, %p96
      %p98 = scmp.ne.s32.totalorder %s90, %s92
      %p99 = scmp.eq.s32.totalorder %s24, 1
      %p100 = por %p98, %p99
      %p101 = scmp.ne.s32.totalorder %s92, %s93
      %p102 = scmp.eq.s32.totalorder %s24, 0
      %p103 = por %p101, %p102
      %p104 = scmp.ne.s32.totalorder %s92, %s93
      %p105 = scmp.eq.s32.totalorder %s25, 1
      %p106 = por %p104, %p105
      %p108 = scmp.ne.s32.totalorder %s93, %s107
      %p109 = scmp.eq.s32.totalorder %s25, 0
      %p110 = por %p108, %p109
      %s112 = sadd.s32 %s111, 1
      %p115 = scmp.eq.s32.totalorder %s19, 1
      %p116 = scmp.ne.s32.totalorder %s111, %s113
      %p117 = scmp.eq.s32.totalorder %s19, 0
      %p118 = por %p116, %p117
      %p119 = scmp.ne.s32.totalorder %s111, %s113
      %p120 = scmp.eq.s32.totalorder %s24, 1
      %p121 = por %p119, %p120
      %p122 = scmp.ne.s32.totalorder %s113, %s114
      %p123 = scmp.eq.s32.totalorder %s24, 0
      %p124 = por %p122, %p123
      %p125 = scmp.ne.s32.totalorder %s113, %s114
      %p126 = scmp.eq.s32.totalorder %s25, 1
      %p127 = por %p125, %p126
      %p129 = scmp.ne.s32.totalorder %s114, %s128
      %p130 = scmp.eq.s32.totalorder %s25, 0
      %p131 = por %p129, %p130
      %s133 = sadd.s32 %s132, 1
      %p136 = scmp.eq.s32.totalorder %s19, 1
      %p137 = scmp.ne.s32.totalorder %s132, %s134
      %p138 = scmp.eq.s32.totalorder %s19, 0
      %p139 = por %p137, %p138
      %p140 = scmp.ne.s32.totalorder %s132, %s134
      %p141 = scmp.eq.s32.totalorder %s24, 1
      %p142 = por %p140, %p141
      %p143 = scmp.ne.s32.totalorder %s134, %s135
      %p144 = scmp.eq.s32.totalorder %s24, 0
      %p145 = por %p143, %p144
      %p146 = scmp.ne.s32.totalorder %s134, %s135
      %p147 = scmp.eq.s32.totalorder %s25, 1
      %p148 = por %p146, %p147
      %p150 = scmp.ne.s32.totalorder %s135, %s149
      %p151 = scmp.eq.s32.totalorder %s25, 0
      %p152 = por %p150, %p151
      %s153 = ssub.s32 %s19, %s26
      %p154 = scmp.eq.s32.totalorder %s153, 0
      %s156 = sadd.s32 %s155, 1
      %s157 = scalar_select %p154, %s155, %s156
      %p160 = pneg %p154
      %p161 = scmp.eq.s32.totalorder %s19, 1
      %p162 = por %p160, %p161
      %p163 = scmp.ne.s32.totalorder %s155, %s158
      %p164 = scmp.eq.s32.totalorder %s19, 0
      %p165 = por %p163, %p164
      %p166 = scmp.ne.s32.totalorder %s155, %s158
      %p167 = scmp.eq.s32.totalorder %s24, 1
      %p168 = por %p166, %p167
      %p169 = scmp.ne.s32.totalorder %s158, %s159
      %p170 = scmp.eq.s32.totalorder %s24, 0
      %p171 = por %p169, %p170
      %p172 = scmp.ne.s32.totalorder %s158, %s159
      %p173 = scmp.eq.s32.totalorder %s25, 1
      %p174 = por %p172, %p173
      %p176 = scmp.ne.s32.totalorder %s159, %s175
      %p177 = scmp.eq.s32.totalorder %s25, 0
      %p178 = por %p176, %p177
      %p179 = scmp.le.s32.totalorder 1, %s19
      %p180 = scmp.lt.s32.totalorder %s19, 3
      %p181 = pnand %p179, %p180
      %p182 = pneg %p181
      // Predicated region
      $region9: #{tpu_custom_call.1} parent=5 // pred_check
        _
      $region10: #{tpu_custom_call.1} parent=5 // pred_check_branch
        %184 = sbr.rel (%p181) target = $region12
      $region11: #{tpu_custom_call.1} parent=5 // pred_region
        %s185 = ssub.s32 %s19, 1
        // Predicated region
        $region13: #{tpu_custom_call.1} parent=11 // pred_check
          %p186 = pneg %p40
        $region14: #{tpu_custom_call.1} parent=11 // pred_check_branch
          %188 = sbr.rel (%p186) target = $region16
        $region15: #{tpu_custom_call.1} parent=11 // pred_region
          %s190 = ssub.s32 4096, 4096
          %191 = vsyncadd [#allocation4], %s190
          %s192 = sshll.u32 [#allocation3], 4
          %s193 = int_to_ptr.vmem [resolvable:$true] %s192
          %198 = dma.hbm_to_vmem [thread:$0]  %s0, 4096, %s193, [#allocation4], 128, 128, 8
        $region16: #{tpu_custom_call.1} parent=11 // pred_fallthru
          _
        // Predicated region
        $region17: #{tpu_custom_call.1} parent=11 // pred_check
          %p199 = pneg %p61
        $region18: #{tpu_custom_call.1} parent=11 // pred_check_branch
          %201 = sbr.rel (%p199) target = $region20
        $region19: #{tpu_custom_call.1} parent=11 // pred_region
          %s203 = ssub.s32 2048, 2048
          %204 = vsyncadd [#allocation7], %s203
          %s205 = sshll.u32 [#allocation6], 4
          %s206 = int_to_ptr.vmem [resolvable:$true] %s205
          %211 = dma.hbm_to_vmem [thread:$0]  %s1, 2048, %s206, [#allocation7], 64, 64, 4
        $region20: #{tpu_custom_call.1} parent=11 // pred_fallthru
          _
        // Predicated region
        $region21: #{tpu_custom_call.1} parent=11 // pred_check
          %p212 = pneg %p82
        $region22: #{tpu_custom_call.1} parent=11 // pred_check_branch
          %214 = sbr.rel (%p212) target = $region24
        $region23: #{tpu_custom_call.1} parent=11 // pred_region
          %s216 = ssub.s32 512, 512
          %217 = vsyncadd [#allocation7], %s216
          %s218 = sshll.u32 [#allocation8], 4
          %s219 = int_to_ptr.vmem [resolvable:$true] %s218
          %224 = dma.hbm_to_vmem [thread:$0]  %s2, 512, %s219, [#allocation7], 64, 64, 4
        $region24: #{tpu_custom_call.1} parent=11 // pred_fallthru
          _
        // Predicated region
        $region25: #{tpu_custom_call.1} parent=11 // pred_check
          %p225 = pneg %p103
        $region26: #{tpu_custom_call.1} parent=11 // pred_check_branch
          %227 = sbr.rel (%p225) target = $region28
        $region27: #{tpu_custom_call.1} parent=11 // pred_region
          %s229 = ssub.s32 16, 16
          %230 = vsyncadd [#allocation10], %s229
          %s232 = sshll.u32 [#allocation9], 4
          %s233 = int_to_ptr.vmem [resolvable:$true] %s232
          %235 = dma.hbm_to_vmem [thread:$0]  %s3, 16, %s233, [#allocation10]
        $region28: #{tpu_custom_call.1} parent=11 // pred_fallthru
          _
        // Predicated region
        $region29: #{tpu_custom_call.1} parent=11 // pred_check
          %p236 = pneg %p124
        $region30: #{tpu_custom_call.1} parent=11 // pred_check_branch
          %238 = sbr.rel (%p236) target = $region32
        $region31: #{tpu_custom_call.1} parent=11 // pred_region
          %s240 = ssub.s32 1024, 1024
          %241 = vsyncadd [#allocation10], %s240
          %s242 = sshll.u32 [#allocation11], 4
          %s243 = int_to_ptr.vmem [resolvable:$true] %s242
          %248 = dma.hbm_to_vmem [thread:$0]  %s4, 1024, %s243, [#allocation10], 64, 64, 4
        $region32: #{tpu_custom_call.1} parent=11 // pred_fallthru
          _
        // Predicated region
        $region33: #{tpu_custom_call.1} parent=11 // pred_check
          %p249 = pneg %p145
        $region34: #{tpu_custom_call.1} parent=11 // pred_check_branch
          %251 = sbr.rel (%p249) target = $region36
        $region35: #{tpu_custom_call.1} parent=11 // pred_region
          %s253 = ssub.s32 16, 16
          %254 = vsyncadd [#allocation13], %s253
          %s256 = sshll.u32 [#allocation12], 4
          %s257 = int_to_ptr.vmem [resolvable:$true] %s256
          %259 = dma.hbm_to_vmem [thread:$0]  %s5, 16, %s257, [#allocation13]
        $region36: #{tpu_custom_call.1} parent=11 // pred_fallthru
          _
      $region12: #{tpu_custom_call.1} parent=5 // pred_fallthru
        _
      %p260 = scmp.lt.s32.totalorder %s19, 2
      // Predicated region
      $region37: #{tpu_custom_call.1} parent=5 // pred_check
        %p261 = pneg %p260
      $region38: #{tpu_custom_call.1} parent=5 // pred_check_branch
        %263 = sbr.rel (%p261) target = $region40
      $region39: #{tpu_custom_call.1} parent=5 // pred_region
        _
      $region40: #{tpu_custom_call.1} parent=5 // pred_fallthru
        _
      %p264 = scmp.le.s32.totalorder 1, %s19
      %p265 = scmp.lt.s32.totalorder %s19, 3
      %p266 = pnand %p264, %p265
      %p267 = pneg %p266
      // Predicated region
      $region41: #{tpu_custom_call.1} parent=5 // pred_check
        _
      $region42: #{tpu_custom_call.1} parent=5 // pred_check_branch
        %269 = sbr.rel (%p266) target = $region44
      $region43: #{tpu_custom_call.1} parent=5 // pred_region
        %s270 = ssub.s32 %s19, 1
        // Predicated region
        $region45: #{tpu_custom_call.1} parent=43 // pred_check
          %p271 = pneg %p40
        $region46: #{tpu_custom_call.1} parent=43 // pred_check_branch
          %273 = sbr.rel (%p271) target = $region48
        $region47: #{tpu_custom_call.1} parent=43 // pred_region
          %274 = dma.done [#allocation4], 4096
        $region48: #{tpu_custom_call.1} parent=43 // pred_fallthru
          _
        // Predicated region
        $region49: #{tpu_custom_call.1} parent=43 // pred_check
          %p275 = pneg %p61
        $region50: #{tpu_custom_call.1} parent=43 // pred_check_branch
          %277 = sbr.rel (%p275) target = $region52
        $region51: #{tpu_custom_call.1} parent=43 // pred_region
          %278 = dma.done [#allocation7], 2048
        $region52: #{tpu_custom_call.1} parent=43 // pred_fallthru
          _
        // Predicated region
        $region53: #{tpu_custom_call.1} parent=43 // pred_check
          %p279 = pneg %p82
        $region54: #{tpu_custom_call.1} parent=43 // pred_check_branch
          %281 = sbr.rel (%p279) target = $region56
        $region55: #{tpu_custom_call.1} parent=43 // pred_region
          %282 = dma.done [#allocation7], 512
        $region56: #{tpu_custom_call.1} parent=43 // pred_fallthru
          _
        // Predicated region
        $region57: #{tpu_custom_call.1} parent=43 // pred_check
          %p283 = pneg %p103
        $region58: #{tpu_custom_call.1} parent=43 // pred_check_branch
          %285 = sbr.rel (%p283) target = $region60
        $region59: #{tpu_custom_call.1} parent=43 // pred_region
          %286 = dma.done [#allocation10], 16
        $region60: #{tpu_custom_call.1} parent=43 // pred_fallthru
          _
        // Predicated region
        $region61: #{tpu_custom_call.1} parent=43 // pred_check
          %p287 = pneg %p124
        $region62: #{tpu_custom_call.1} parent=43 // pred_check_branch
          %289 = sbr.rel (%p287) target = $region64
        $region63: #{tpu_custom_call.1} parent=43 // pred_region
          %290 = dma.done [#allocation10], 1024
        $region64: #{tpu_custom_call.1} parent=43 // pred_fallthru
          _
        // Predicated region
        $region65: #{tpu_custom_call.1} parent=43 // pred_check
          %p291 = pneg %p145
        $region66: #{tpu_custom_call.1} parent=43 // pred_check_branch
          %293 = sbr.rel (%p291) target = $region68
        $region67: #{tpu_custom_call.1} parent=43 // pred_region
          %294 = dma.done [#allocation13], 16
        $region68: #{tpu_custom_call.1} parent=43 // pred_fallthru
          _
        %p295 = pneg %p40
        %p296 = pneg %p37
        %p297 = pneg %p61
        %p298 = pneg %p58
        %p299 = pneg %p82
        %p300 = pneg %p79
        %p301 = pneg %p103
        %p302 = pneg %p100
        %p303 = pneg %p124
        %p304 = pneg %p121
        %p305 = pneg %p145
        %p306 = pneg %p142
        %p307 = pneg %p171
        %p308 = pneg %p168
        %s309 = sand.u32 %s158, 1
        %s310 = scalar_lea.sflag [#allocation5], %s309
        %s311 = sand.u32 %s158, 1
        %s312 = smul.addr %s311, 128
        %s313 = scalar_lea.vmem [#allocation14], %s312
        %s314 = smul.u32 16, %s24
        %s316 = smul.u32 %s24, 128
        %v317 = vld [vmem:[#allocation3] sm:$0xff]
        %v318 = vld [vmem:[#allocation3 + $0x8] sm:$0xff]
        %v319 = vld [vmem:[#allocation3 + $0x10] sm:$0xff]
        %v320 = vld [vmem:[#allocation3 + $0x18] sm:$0xff]
        %v321 = vld [vmem:[#allocation3 + $0x20] sm:$0xff]
        %v322 = vld [vmem:[#allocation3 + $0x28] sm:$0xff]
        %v323 = vld [vmem:[#allocation3 + $0x30] sm:$0xff]
        %v324 = vld [vmem:[#allocation3 + $0x38] sm:$0xff]
        %v325 = vld [vmem:[#allocation3 + $0x40] sm:$0xff]
        %v326 = vld [vmem:[#allocation3 + $0x48] sm:$0xff]
        %v327 = vld [vmem:[#allocation3 + $0x50] sm:$0xff]
        %v328 = vld [vmem:[#allocation3 + $0x58] sm:$0xff]
        %v329 = vld [vmem:[#allocation3 + $0x60] sm:$0xff]
        %v330 = vld [vmem:[#allocation3 + $0x68] sm:$0xff]
        %v331 = vld [vmem:[#allocation3 + $0x70] sm:$0xff]
        %v332 = vld [vmem:[#allocation3 + $0x78] sm:$0xff]
        %v333 = vld [vmem:[#allocation3 + $0x80] sm:$0xff]
        %v334 = vld [vmem:[#allocation3 + $0x88] sm:$0xff]
        %v335 = vld [vmem:[#allocation3 + $0x90] sm:$0xff]
        %v336 = vld [vmem:[#allocation3 + $0x98] sm:$0xff]
        %v337 = vld [vmem:[#allocation3 + $0xa0] sm:$0xff]
        %v338 = vld [vmem:[#allocation3 + $0xa8] sm:$0xff]
        %v339 = vld [vmem:[#allocation3 + $0xb0] sm:$0xff]
        %v340 = vld [vmem:[#allocation3 + $0xb8] sm:$0xff]
        %v341 = vld [vmem:[#allocation3 + $0xc0] sm:$0xff]
        %v342 = vld [vmem:[#allocation3 + $0xc8] sm:$0xff]
        %v343 = vld [vmem:[#allocation3 + $0xd0] sm:$0xff]
        %v344 = vld [vmem:[#allocation3 + $0xd8] sm:$0xff]
        %v345 = vld [vmem:[#allocation3 + $0xe0] sm:$0xff]
        %v346 = vld [vmem:[#allocation3 + $0xe8] sm:$0xff]
        %v347 = vld [vmem:[#allocation3 + $0xf0] sm:$0xff]
        %v348 = vld [vmem:[#allocation3 + $0xf8] sm:$0xff]
        %v349 = vld [vmem:[#allocation6] sm:$0xf]
        %v350 = vld [vmem:[#allocation6 + $0x4] sm:$0xf]
        %v351 = vld [vmem:[#allocation6 + $0x8] sm:$0xf]
        %v352 = vld [vmem:[#allocation6 + $0xc] sm:$0xf]
        %v353 = vld [vmem:[#allocation6 + $0x10] sm:$0xf]
        %v354 = vld [vmem:[#allocation6 + $0x14] sm:$0xf]
        %v355 = vld [vmem:[#allocation6 + $0x18] sm:$0xf]
        %v356 = vld [vmem:[#allocation6 + $0x1c] sm:$0xf]
        %v357 = vld [vmem:[#allocation6 + $0x20] sm:$0xf]
        %v358 = vld [vmem:[#allocation6 + $0x24] sm:$0xf]
        %v359 = vld [vmem:[#allocation6 + $0x28] sm:$0xf]
        %v360 = vld [vmem:[#allocation6 + $0x2c] sm:$0xf]
        %v361 = vld [vmem:[#allocation6 + $0x30] sm:$0xf]
        %v362 = vld [vmem:[#allocation6 + $0x34] sm:$0xf]
        %v363 = vld [vmem:[#allocation6 + $0x38] sm:$0xf]
        %v364 = vld [vmem:[#allocation6 + $0x3c] sm:$0xf]
        %v365 = vld [vmem:[#allocation6 + $0x40] sm:$0xf]
        %v366 = vld [vmem:[#allocation6 + $0x44] sm:$0xf]
        %v367 = vld [vmem:[#allocation6 + $0x48] sm:$0xf]
        %v368 = vld [vmem:[#allocation6 + $0x4c] sm:$0xf]
        %v369 = vld [vmem:[#allocation6 + $0x50] sm:$0xf]
        %v370 = vld [vmem:[#allocation6 + $0x54] sm:$0xf]
        %v371 = vld [vmem:[#allocation6 + $0x58] sm:$0xf]
        %v372 = vld [vmem:[#allocation6 + $0x5c] sm:$0xf]
        %v373 = vld [vmem:[#allocation6 + $0x60] sm:$0xf]
        %v374 = vld [vmem:[#allocation6 + $0x64] sm:$0xf]
        %v375 = vld [vmem:[#allocation6 + $0x68] sm:$0xf]
        %v376 = vld [vmem:[#allocation6 + $0x6c] sm:$0xf]
        %v377 = vld [vmem:[#allocation6 + $0x70] sm:$0xf]
        %v378 = vld [vmem:[#allocation6 + $0x74] sm:$0xf]
        %v379 = vld [vmem:[#allocation6 + $0x78] sm:$0xf]
        %v380 = vld [vmem:[#allocation6 + $0x7c] sm:$0xf]
        %v413 = vunpack.c.l.b16 %v317
        %v414 = vunpack.c.h.b16 %v317
        %v415 = vunpack.c.l.b16 %v318
        %v416 = vunpack.c.h.b16 %v318
        %v417 = vunpack.c.l.b16 %v319
        %v418 = vunpack.c.h.b16 %v319
        %v419 = vunpack.c.l.b16 %v320
        %v420 = vunpack.c.h.b16 %v320
        %v421 = vunpack.c.l.b16 %v321
        %v422 = vunpack.c.h.b16 %v321
        %v423 = vunpack.c.l.b16 %v322
        %v424 = vunpack.c.h.b16 %v322
        %v425 = vunpack.c.l.b16 %v323
        %v426 = vunpack.c.h.b16 %v323
        %v427 = vunpack.c.l.b16 %v324
        %v428 = vunpack.c.h.b16 %v324
        %v429 = vunpack.c.l.b16 %v325
        %v430 = vunpack.c.h.b16 %v325
        %v431 = vunpack.c.l.b16 %v326
        %v432 = vunpack.c.h.b16 %v326
        %v433 = vunpack.c.l.b16 %v327
        %v434 = vunpack.c.h.b16 %v327
        %v435 = vunpack.c.l.b16 %v328
        %v436 = vunpack.c.h.b16 %v328
        %v437 = vunpack.c.l.b16 %v329
        %v438 = vunpack.c.h.b16 %v329
        %v439 = vunpack.c.l.b16 %v330
        %v440 = vunpack.c.h.b16 %v330
        %v441 = vunpack.c.l.b16 %v331
        %v442 = vunpack.c.h.b16 %v331
        %v443 = vunpack.c.l.b16 %v332
        %v444 = vunpack.c.h.b16 %v332
        %v445 = vunpack.c.l.b16 %v333
        %v446 = vunpack.c.h.b16 %v333
        %v447 = vunpack.c.l.b16 %v334
        %v448 = vunpack.c.h.b16 %v334
        %v449 = vunpack.c.l.b16 %v335
        %v450 = vunpack.c.h.b16 %v335
        %v451 = vunpack.c.l.b16 %v336
        %v452 = vunpack.c.h.b16 %v336
        %v453 = vunpack.c.l.b16 %v337
        %v454 = vunpack.c.h.b16 %v337
        %v455 = vunpack.c.l.b16 %v338
        %v456 = vunpack.c.h.b16 %v338
        %v457 = vunpack.c.l.b16 %v339
        %v458 = vunpack.c.h.b16 %v339
        %v459 = vunpack.c.l.b16 %v340
        %v460 = vunpack.c.h.b16 %v340
        %v461 = vunpack.c.l.b16 %v341
        %v462 = vunpack.c.h.b16 %v341
        %v463 = vunpack.c.l.b16 %v342
        %v464 = vunpack.c.h.b16 %v342
        %v465 = vunpack.c.l.b16 %v343
        %v466 = vunpack.c.h.b16 %v343
        %v467 = vunpack.c.l.b16 %v344
        %v468 = vunpack.c.h.b16 %v344
        %v469 = vunpack.c.l.b16 %v345
        %v470 = vunpack.c.h.b16 %v345
        %v471 = vunpack.c.l.b16 %v346
        %v472 = vunpack.c.h.b16 %v346
        %v473 = vunpack.c.l.b16 %v347
        %v474 = vunpack.c.h.b16 %v347
        %v475 = vunpack.c.l.b16 %v348
        %v476 = vunpack.c.h.b16 %v348
        %v477 = vpack.c.b16 %v415, %v413
        %v478 = vpack.c.b16 %v416, %v414
        %v479 = vpack.c.b16 %v419, %v417
        %v480 = vpack.c.b16 %v420, %v418
        %v481 = vpack.c.b16 %v423, %v421
        %v482 = vpack.c.b16 %v424, %v422
        %v483 = vpack.c.b16 %v427, %v425
        %v484 = vpack.c.b16 %v428, %v426
        %v485 = vpack.c.b16 %v431, %v429
        %v486 = vpack.c.b16 %v432, %v430
        %v487 = vpack.c.b16 %v435, %v433
        %v488 = vpack.c.b16 %v436, %v434
        %v489 = vpack.c.b16 %v439, %v437
        %v490 = vpack.c.b16 %v440, %v438
        %v491 = vpack.c.b16 %v443, %v441
        %v492 = vpack.c.b16 %v444, %v442
        %v493 = vpack.c.b16 %v447, %v445
        %v494 = vpack.c.b16 %v448, %v446
        %v495 = vpack.c.b16 %v451, %v449
        %v496 = vpack.c.b16 %v452, %v450
        %v497 = vpack.c.b16 %v455, %v453
        %v498 = vpack.c.b16 %v456, %v454
        %v499 = vpack.c.b16 %v459, %v457
        %v500 = vpack.c.b16 %v460, %v458
        %v501 = vpack.c.b16 %v463, %v461
        %v502 = vpack.c.b16 %v464, %v462
        %v503 = vpack.c.b16 %v467, %v465
        %v504 = vpack.c.b16 %v468, %v466
        %v505 = vpack.c.b16 %v471, %v469
        %v506 = vpack.c.b16 %v472, %v470
        %v507 = vpack.c.b16 %v475, %v473
        %v508 = vpack.c.b16 %v476, %v474
        %v573 = vunpack.c.l.b16 %v349
        %v574 = vunpack.c.l.b16 %v350
        %v575 = vunpack.c.l.b16 %v351
        %v576 = vunpack.c.l.b16 %v352
        %v577 = vunpack.c.l.b16 %v353
        %v578 = vunpack.c.l.b16 %v354
        %v579 = vunpack.c.l.b16 %v355
        %v580 = vunpack.c.l.b16 %v356
        %v581 = vunpack.c.l.b16 %v357
        %v582 = vunpack.c.l.b16 %v358
        %v583 = vunpack.c.l.b16 %v359
        %v584 = vunpack.c.l.b16 %v360
        %v585 = vunpack.c.l.b16 %v361
        %v586 = vunpack.c.l.b16 %v362
        %v587 = vunpack.c.l.b16 %v363
        %v588 = vunpack.c.l.b16 %v364
        %v589 = vunpack.c.l.b16 %v365
        %v590 = vunpack.c.l.b16 %v366
        %v591 = vunpack.c.l.b16 %v367
        %v592 = vunpack.c.l.b16 %v368
        %v593 = vunpack.c.l.b16 %v369
        %v594 = vunpack.c.l.b16 %v370
        %v595 = vunpack.c.l.b16 %v371
        %v596 = vunpack.c.l.b16 %v372
        %v597 = vunpack.c.l.b16 %v373
        %v598 = vunpack.c.l.b16 %v374
        %v599 = vunpack.c.l.b16 %v375
        %v600 = vunpack.c.l.b16 %v376
        %v601 = vunpack.c.l.b16 %v377
        %v602 = vunpack.c.l.b16 %v378
        %v603 = vunpack.c.l.b16 %v379
        %v604 = vunpack.c.l.b16 %v380
        %v605 = vpack.c.b16 %v574, %v573
        %v606 = vpack.c.b16 %v576, %v575
        %v607 = vpack.c.b16 %v578, %v577
        %v608 = vpack.c.b16 %v580, %v579
        %v609 = vpack.c.b16 %v582, %v581
        %v610 = vpack.c.b16 %v584, %v583
        %v611 = vpack.c.b16 %v586, %v585
        %v612 = vpack.c.b16 %v588, %v587
        %v613 = vpack.c.b16 %v590, %v589
        %v614 = vpack.c.b16 %v592, %v591
        %v615 = vpack.c.b16 %v594, %v593
        %v616 = vpack.c.b16 %v596, %v595
        %v617 = vpack.c.b16 %v598, %v597
        %v618 = vpack.c.b16 %v600, %v599
        %v619 = vpack.c.b16 %v602, %v601
        %v620 = vpack.c.b16 %v604, %v603
        %637 = vmatprep.subr.bf16.mxu0 0
        %638 = vmatpush1.bf16.msra.mxu0 %v605
        %639 = vmatprep.subr.bf16.mxu0 0
        %640 = vmatpush1.bf16.msra.mxu0 %v606
        %641 = vmatprep.subr.bf16.mxu0 0
        %642 = vmatpush1.bf16.msra.mxu0 %v607
        %643 = vmatprep.subr.bf16.mxu0 0
        %644 = vmatpush1.bf16.msra.mxu0 %v608
        %645 = vmatprep.subr.bf16.mxu0 0
        %646 = vmatpush1.bf16.msra.mxu0 %v609
        %647 = vmatprep.subr.bf16.mxu0 0
        %648 = vmatpush1.bf16.msra.mxu0 %v610
        %649 = vmatprep.subr.bf16.mxu0 0
        %650 = vmatpush1.bf16.msra.mxu0 %v611
        %651 = vmatprep.subr.bf16.mxu0 0
        %652 = vmatpush1.bf16.msra.mxu0 %v612
        %653 = vmatprep.subr.bf16.mxu0 0
        %654 = vmatpush1.bf16.msra.mxu0 %v613
        %655 = vmatprep.subr.bf16.mxu0 0
        %656 = vmatpush1.bf16.msra.mxu0 %v614
        %657 = vmatprep.subr.bf16.mxu0 0
        %658 = vmatpush1.bf16.msra.mxu0 %v615
        %659 = vmatprep.subr.bf16.mxu0 0
        %660 = vmatpush1.bf16.msra.mxu0 %v616
        %661 = vmatprep.subr.bf16.mxu0 0
        %662 = vmatpush1.bf16.msra.mxu0 %v617
        %663 = vmatprep.subr.bf16.mxu0 0
        %664 = vmatpush1.bf16.msra.mxu0 %v618
        %665 = vmatprep.subr.bf16.mxu0 0
        %666 = vmatpush1.bf16.msra.mxu0 %v619
        %667 = vmatprep.subr.bf16.mxu0 0
        %668 = vmatpush1.bf16.msra.mxu0 %v620
        %669 = vmatprep.mubr.bf16.mxu0 %v478
        %670 = vmatmul.mubr.bf16.gmra.mrb[0].mxu0 %v477
        %v671 = vpop.f32.mrb[0].mxu0
        %v672 = vadd.f32 0.0, %v671
        %v673 = vpop.f32.mrb[0].mxu0
        %v674 = vpop.f32.mrb[0].mxu0
        %v675 = vadd.f32 0.0, %v674
        %v676 = vpop.f32.mrb[0].mxu0
        %677 = vmatprep.mubr.bf16.mxu0 %v480
        %678 = vmatmul.mubr.bf16.gmra.mrb[0].mxu0 %v479
        %v679 = vpop.f32.mrb[0].mxu0
        %v680 = vadd.f32 0.0, %v679
        %v681 = vpop.f32.mrb[0].mxu0
        %v682 = vpop.f32.mrb[0].mxu0
        %v683 = vadd.f32 0.0, %v682
        %v684 = vpop.f32.mrb[0].mxu0
        %685 = vmatprep.mubr.bf16.mxu0 %v482
        %686 = vmatmul.mubr.bf16.gmra.mrb[0].mxu0 %v481
        %v687 = vpop.f32.mrb[0].mxu0
        %v688 = vadd.f32 0.0, %v687
        %v689 = vpop.f32.mrb[0].mxu0
        %v690 = vpop.f32.mrb[0].mxu0
        %v691 = vadd.f32 0.0, %v690
        %v692 = vpop.f32.mrb[0].mxu0
        %693 = vmatprep.mubr.bf16.mxu0 %v484
        %694 = vmatmul.mubr.bf16.gmra.mrb[0].mxu0 %v483
        %v695 = vpop.f32.mrb[0].mxu0
        %v696 = vadd.f32 0.0, %v695
        %v697 = vpop.f32.mrb[0].mxu0
        %v698 = vpop.f32.mrb[0].mxu0
        %v699 = vadd.f32 0.0, %v698
        %v700 = vpop.f32.mrb[0].mxu0
        %701 = vmatprep.mubr.bf16.mxu0 %v486
        %702 = vmatmul.mubr.bf16.gmra.mrb[0].mxu0 %v485
        %v703 = vpop.f32.mrb[0].mxu0
        %v704 = vadd.f32 0.0, %v703
        %v705 = vpop.f32.mrb[0].mxu0
        %v706 = vpop.f32.mrb[0].mxu0
        %v707 = vadd.f32 0.0, %v706
        %v708 = vpop.f32.mrb[0].mxu0
        %709 = vmatprep.mubr.bf16.mxu0 %v488
        %710 = vmatmul.mubr.bf16.gmra.mrb[0].mxu0 %v487
        %v711 = vpop.f32.mrb[0].mxu0
        %v712 = vadd.f32 0.0, %v711
        %v713 = vpop.f32.mrb[0].mxu0
        %v714 = vpop.f32.mrb[0].mxu0
        %v715 = vadd.f32 0.0, %v714
        %v716 = vpop.f32.mrb[0].mxu0
        %717 = vmatprep.mubr.bf16.mxu0 %v490
        %718 = vmatmul.mubr.bf16.gmra.mrb[0].mxu0 %v489
        %v719 = vpop.f32.mrb[0].mxu0
        %v720 = vadd.f32 0.0, %v719
        %v721 = vpop.f32.mrb[0].mxu0
        %v722 = vpop.f32.mrb[0].mxu0
        %v723 = vadd.f32 0.0, %v722
        %v724 = vpop.f32.mrb[0].mxu0
        %725 = vmatprep.mubr.bf16.mxu0 %v492
        %726 = vmatmul.mubr.bf16.gmra.mrb[0].mxu0 %v491
        %v727 = vpop.f32.mrb[0].mxu0
        %v728 = vadd.f32 0.0, %v727
        %v729 = vpop.f32.mrb[0].mxu0
        %v730 = vpop.f32.mrb[0].mxu0
        %v731 = vadd.f32 0.0, %v730
        %v732 = vpop.f32.mrb[0].mxu0
        %733 = vmatprep.mubr.bf16.mxu0 %v494
        %734 = vmatmul.mubr.bf16.gmra.mrb[0].mxu0 %v493
        %v735 = vpop.f32.mrb[0].mxu0
        %v736 = vadd.f32 0.0, %v735
        %v737 = vpop.f32.mrb[0].mxu0
        %v738 = vpop.f32.mrb[0].mxu0
        %v739 = vadd.f32 0.0, %v738
        %v740 = vpop.f32.mrb[0].mxu0
        %741 = vmatprep.mubr.bf16.mxu0 %v496
        %742 = vmatmul.mubr.bf16.gmra.mrb[0].mxu0 %v495
        %v743 = vpop.f32.mrb[0].mxu0
        %v744 = vadd.f32 0.0, %v743
        %v745 = vpop.f32.mrb[0].mxu0
        %v746 = vpop.f32.mrb[0].mxu0
        %v747 = vadd.f32 0.0, %v746
        %v748 = vpop.f32.mrb[0].mxu0
        %749 = vmatprep.mubr.bf16.mxu0 %v498
        %750 = vmatmul.mubr.bf16.gmra.mrb[0].mxu0 %v497
        %v751 = vpop.f32.mrb[0].mxu0
        %v752 = vadd.f32 0.0, %v751
        %v753 = vpop.f32.mrb[0].mxu0
        %v754 = vpop.f32.mrb[0].mxu0
        %v755 = vadd.f32 0.0, %v754
        %v756 = vpop.f32.mrb[0].mxu0
        %757 = vmatprep.mubr.bf16.mxu0 %v500
        %758 = vmatmul.mubr.bf16.gmra.mrb[0].mxu0 %v499
        %v759 = vpop.f32.mrb[0].mxu0
        %v760 = vadd.f32 0.0, %v759
        %v761 = vpop.f32.mrb[0].mxu0
        %v762 = vpop.f32.mrb[0].mxu0
        %v763 = vadd.f32 0.0, %v762
        %v764 = vpop.f32.mrb[0].mxu0
        %765 = vmatprep.mubr.bf16.mxu0 %v502
        %766 = vmatmul.mubr.bf16.gmra.mrb[0].mxu0 %v501
        %v767 = vpop.f32.mrb[0].mxu0
        %v768 = vadd.f32 0.0, %v767
        %v769 = vpop.f32.mrb[0].mxu0
        %v770 = vpop.f32.mrb[0].mxu0
        %v771 = vadd.f32 0.0, %v770
        %v772 = vpop.f32.mrb[0].mxu0
        %773 = vmatprep.mubr.bf16.mxu0 %v504
        %774 = vmatmul.mubr.bf16.gmra.mrb[0].mxu0 %v503
        %v775 = vpop.f32.mrb[0].mxu0
        %v776 = vadd.f32 0.0, %v775
        %v777 = vpop.f32.mrb[0].mxu0
        %v778 = vpop.f32.mrb[0].mxu0
        %v779 = vadd.f32 0.0, %v778
        %v780 = vpop.f32.mrb[0].mxu0
        %781 = vmatprep.mubr.bf16.mxu0 %v506
        %782 = vmatmul.mubr.bf16.gmra.mrb[0].mxu0 %v505
        %v783 = vpop.f32.mrb[0].mxu0
        %v784 = vadd.f32 0.0, %v783
        %v785 = vpop.f32.mrb[0].mxu0
        %v786 = vpop.f32.mrb[0].mxu0
        %v787 = vadd.f32 0.0, %v786
        %v788 = vpop.f32.mrb[0].mxu0
        %789 = vmatprep.mubr.bf16.mxu0 %v508
        %790 = vmatmul.mubr.bf16.gmra.mrb[0].mxu0 %v507
        %v791 = vpop.f32.mrb[0].mxu0
        %v792 = vadd.f32 0.0, %v791
        %v793 = vpop.f32.mrb[0].mxu0
        %v794 = vpop.f32.mrb[0].mxu0
        %v795 = vadd.f32 0.0, %v794
        %v796 = vpop.f32.mrb[0].mxu0
        %797 = vdwg.mxu0
        %v798 = vunpack.c.l.bf16 %v349
        %v799 = vunpack.c.l.bf16 %v350
        %v800 = vunpack.c.l.bf16 %v351
        %v801 = vunpack.c.l.bf16 %v352
        %v802 = vunpack.c.l.bf16 %v353
        %v803 = vunpack.c.l.bf16 %v354
        %v804 = vunpack.c.l.bf16 %v355
        %v805 = vunpack.c.l.bf16 %v356
        %v806 = vunpack.c.l.bf16 %v357
        %v807 = vunpack.c.l.bf16 %v358
        %v808 = vunpack.c.l.bf16 %v359
        %v809 = vunpack.c.l.bf16 %v360
        %v810 = vunpack.c.l.bf16 %v361
        %v811 = vunpack.c.l.bf16 %v362
        %v812 = vunpack.c.l.bf16 %v363
        %v813 = vunpack.c.l.bf16 %v364
        %v814 = vunpack.c.l.bf16 %v365
        %v815 = vunpack.c.l.bf16 %v366
        %v816 = vunpack.c.l.bf16 %v367
        %v817 = vunpack.c.l.bf16 %v368
        %v818 = vunpack.c.l.bf16 %v369
        %v819 = vunpack.c.l.bf16 %v370
        %v820 = vunpack.c.l.bf16 %v371
        %v821 = vunpack.c.l.bf16 %v372
        %v822 = vunpack.c.l.bf16 %v373
        %v823 = vunpack.c.l.bf16 %v374
        %v824 = vunpack.c.l.bf16 %v375
        %v825 = vunpack.c.l.bf16 %v376
        %v826 = vunpack.c.l.bf16 %v377
        %v827 = vunpack.c.l.bf16 %v378
        %v828 = vunpack.c.l.bf16 %v379
        %v829 = vunpack.c.l.bf16 %v380
        %862 = vrot.lane.b32.xlu0 %v672, 32
        %v863 = vpop.permute.xlu0 %862
        %864 = vrot.lane.b32.xlu0 %v675, 32
        %v865 = vpop.permute.xlu0 %864
        %866 = vrot.lane.b32.xlu0 %v680, 32
        %v867 = vpop.permute.xlu0 %866
        %868 = vrot.lane.b32.xlu0 %v683, 32
        %v869 = vpop.permute.xlu0 %868
        %870 = vrot.lane.b32.xlu0 %v688, 32
        %v871 = vpop.permute.xlu0 %870
        %872 = vrot.lane.b32.xlu0 %v691, 32
        %v873 = vpop.permute.xlu0 %872
        %874 = vrot.lane.b32.xlu0 %v696, 32
        %v875 = vpop.permute.xlu0 %874
        %876 = vrot.lane.b32.xlu0 %v699, 32
        %v877 = vpop.permute.xlu0 %876
        %878 = vrot.lane.b32.xlu0 %v704, 32
        %v879 = vpop.permute.xlu0 %878
        %880 = vrot.lane.b32.xlu0 %v707, 32
        %v881 = vpop.permute.xlu0 %880
        %882 = vrot.lane.b32.xlu0 %v712, 32
        %v883 = vpop.permute.xlu0 %882
        %884 = vrot.lane.b32.xlu0 %v715, 32
        %v885 = vpop.permute.xlu0 %884
        %886 = vrot.lane.b32.xlu0 %v720, 32
        %v887 = vpop.permute.xlu0 %886
        %888 = vrot.lane.b32.xlu0 %v723, 32
        %v889 = vpop.permute.xlu0 %888
        %890 = vrot.lane.b32.xlu0 %v728, 32
        %v891 = vpop.permute.xlu0 %890
        %892 = vrot.lane.b32.xlu0 %v731, 32
        %v893 = vpop.permute.xlu0 %892
        %894 = vrot.lane.b32.xlu0 %v736, 32
        %v895 = vpop.permute.xlu0 %894
        %896 = vrot.lane.b32.xlu0 %v739, 32
        %v897 = vpop.permute.xlu0 %896
        %898 = vrot.lane.b32.xlu0 %v744, 32
        %v899 = vpop.permute.xlu0 %898
        %900 = vrot.lane.b32.xlu0 %v747, 32
        %v901 = vpop.permute.xlu0 %900
        %902 = vrot.lane.b32.xlu0 %v752, 32
        %v903 = vpop.permute.xlu0 %902
        %904 = vrot.lane.b32.xlu0 %v755, 32
        %v905 = vpop.permute.xlu0 %904
        %906 = vrot.lane.b32.xlu0 %v760, 32
        %v907 = vpop.permute.xlu0 %906
        %908 = vrot.lane.b32.xlu0 %v763, 32
        %v909 = vpop.permute.xlu0 %908
        %910 = vrot.lane.b32.xlu0 %v768, 32
        %v911 = vpop.permute.xlu0 %910
        %912 = vrot.lane.b32.xlu0 %v771, 32
        %v913 = vpop.permute.xlu0 %912
        %914 = vrot.lane.b32.xlu0 %v776, 32
        %v915 = vpop.permute.xlu0 %914
        %916 = vrot.lane.b32.xlu0 %v779, 32
        %v917 = vpop.permute.xlu0 %916
        %918 = vrot.lane.b32.xlu0 %v784, 32
        %v919 = vpop.permute.xlu0 %918
        %920 = vrot.lane.b32.xlu0 %v787, 32
        %v921 = vpop.permute.xlu0 %920
        %922 = vrot.lane.b32.xlu0 %v792, 32
        %v923 = vpop.permute.xlu0 %922
        %924 = vrot.lane.b32.xlu0 %v795, 32
        %v925 = vpop.permute.xlu0 %924
        %vm958 = vcmask 261120
        %v959 = vsel %vm958, %v798, %v863
        %v960 = vsel %vm958, %v799, %v865
        %v961 = vsel %vm958, %v800, %v867
        %v962 = vsel %vm958, %v801, %v869
        %v963 = vsel %vm958, %v802, %v871
        %v964 = vsel %vm958, %v803, %v873
        %v965 = vsel %vm958, %v804, %v875
        %v966 = vsel %vm958, %v805, %v877
        %v967 = vsel %vm958, %v806, %v879
        %v968 = vsel %vm958, %v807, %v881
        %v969 = vsel %vm958, %v808, %v883
        %v970 = vsel %vm958, %v809, %v885
        %v971 = vsel %vm958, %v810, %v887
        %v972 = vsel %vm958, %v811, %v889
        %v973 = vsel %vm958, %v812, %v891
        %v974 = vsel %vm958, %v813, %v893
        %v975 = vsel %vm958, %v814, %v895
        %v976 = vsel %vm958, %v815, %v897
        %v977 = vsel %vm958, %v816, %v899
        %v978 = vsel %vm958, %v817, %v901
        %v979 = vsel %vm958, %v818, %v903
        %v980 = vsel %vm958, %v819, %v905
        %v981 = vsel %vm958, %v820, %v907
        %v982 = vsel %vm958, %v821, %v909
        %v983 = vsel %vm958, %v822, %v911
        %v984 = vsel %vm958, %v823, %v913
        %v985 = vsel %vm958, %v824, %v915
        %v986 = vsel %vm958, %v825, %v917
        %v987 = vsel %vm958, %v826, %v919
        %v988 = vsel %vm958, %v827, %v921
        %v989 = vsel %vm958, %v828, %v923
        %v990 = vsel %vm958, %v829, %v925
        %v991 = vpack.c.bf16 %v960, %v959
        %v992 = vpack.c.bf16 %v962, %v961
        %v993 = vpack.c.bf16 %v964, %v963
        %v994 = vpack.c.bf16 %v966, %v965
        %v995 = vpack.c.bf16 %v968, %v967
        %v996 = vpack.c.bf16 %v970, %v969
        %v997 = vpack.c.bf16 %v972, %v971
        %v998 = vpack.c.bf16 %v974, %v973
        %v999 = vpack.c.bf16 %v976, %v975
        %v1000 = vpack.c.bf16 %v978, %v977
        %v1001 = vpack.c.bf16 %v980, %v979
        %v1002 = vpack.c.bf16 %v982, %v981
        %v1003 = vpack.c.bf16 %v984, %v983
        %v1004 = vpack.c.bf16 %v986, %v985
        %v1005 = vpack.c.bf16 %v988, %v987
        %v1006 = vpack.c.bf16 %v990, %v989
        %v1007 = vld [vmem:[#allocation8] sm:$0xf]
        %v1008 = vld [vmem:[#allocation8 + $0x4] sm:$0xf]
        %v1009 = vld [vmem:[#allocation8 + $0x8] sm:$0xf]
        %v1010 = vld [vmem:[#allocation8 + $0xc] sm:$0xf]
        %v1011 = vld [vmem:[#allocation8 + $0x10] sm:$0xf]
        %v1012 = vld [vmem:[#allocation8 + $0x14] sm:$0xf]
        %v1013 = vld [vmem:[#allocation8 + $0x18] sm:$0xf]
        %v1014 = vld [vmem:[#allocation8 + $0x1c] sm:$0xf]
        %v1015 = vld [vmem:[#allocation9] sm:$0x1]
        %v1017 = vlaneseq
        %v1018 = vshrl.u32 %v1017, 7
        %v1019 = vsub.s32 0, %v1018
        %v1020 = vrot.slane %v1015, %v1019
        %v1030 = vunpack.c.l.b16 %v1007
        %v1031 = vunpack.c.l.b16 %v1008
        %v1032 = vunpack.c.l.b16 %v1009
        %v1033 = vunpack.c.l.b16 %v1010
        %v1034 = vunpack.c.l.b16 %v1011
        %v1035 = vunpack.c.l.b16 %v1012
        %v1036 = vunpack.c.l.b16 %v1013
        %v1037 = vunpack.c.l.b16 %v1014
        %v1038 = vpack.c.b16 %v1031, %v1030
        %v1039 = vpack.c.b16 %v1033, %v1032
        %v1040 = vpack.c.b16 %v1035, %v1034
        %v1041 = vpack.c.b16 %v1037, %v1036
        %vm1046 = vcmask 523264
        %v1048 = vsel %vm1046, %v991, 0
        %v1051 = vsel %vm1046, %v992, 0
        %v1054 = vsel %vm1046, %v993, 0
        %v1057 = vsel %vm1046, %v994, 0
        %v1060 = vsel %vm1046, %v995, 0
        %v1063 = vsel %vm1046, %v996, 0
        %v1066 = vsel %vm1046, %v997, 0
        %v1069 = vsel %vm1046, %v998, 0
        %v1072 = vsel %vm1046, %v999, 0
        %v1075 = vsel %vm1046, %v1000, 0
        %v1078 = vsel %vm1046, %v1001, 0
        %v1081 = vsel %vm1046, %v1002, 0
        %v1084 = vsel %vm1046, %v1003, 0
        %v1087 = vsel %vm1046, %v1004, 0
        %v1090 = vsel %vm1046, %v1005, 0
        %v1093 = vsel %vm1046, %v1006, 0
        %1095 = vmatprep.subr.bf16.mxu0 0
        %1096 = vmatpush1.bf16.msra.mxu0 %v1038
        %1097 = vmatprep.subr.bf16.mxu0 0
        %1098 = vmatpush1.bf16.msra.mxu0 %v1039
        %1099 = vmatprep.subr.bf16.mxu0 0
        %1100 = vmatpush1.bf16.msra.mxu0 %v1040
        %1101 = vmatprep.subr.bf16.mxu0 0
        %1102 = vmatpush1.bf16.msra.mxu0 %v1041
        %1103 = vmatprep.subr.bf16.mxu0 0
        %1104 = vmatpush1.bf16.msra.mxu0 0
        %1105 = vmatprep.subr.bf16.mxu0 0
        %1106 = vmatpush1.bf16.msra.mxu0 0
        %1107 = vmatprep.subr.bf16.mxu0 0
        %1108 = vmatpush1.bf16.msra.mxu0 0
        %1109 = vmatprep.subr.bf16.mxu0 0
        %1110 = vmatpush1.bf16.msra.mxu0 0
        %1111 = vmatprep.subr.bf16.mxu0 0
        %1112 = vmatpush1.bf16.msra.mxu0 0
        %1113 = vmatprep.subr.bf16.mxu0 0
        %1114 = vmatpush1.bf16.msra.mxu0 0
        %1115 = vmatprep.subr.bf16.mxu0 0
        %1116 = vmatpush1.bf16.msra.mxu0 0
        %1117 = vmatprep.subr.bf16.mxu0 0
        %1118 = vmatpush1.bf16.msra.mxu0 0
        %1119 = vmatprep.subr.bf16.mxu0 0
        %1120 = vmatpush1.bf16.msra.mxu0 0
        %1121 = vmatprep.subr.bf16.mxu0 0
        %1122 = vmatpush1.bf16.msra.mxu0 0
        %1123 = vmatprep.subr.bf16.mxu0 0
        %1124 = vmatpush1.bf16.msra.mxu0 0
        %1125 = vmatprep.subr.bf16.mxu0 0
        %1126 = vmatpush1.bf16.msra.mxu0 0
        %1127 = vmatprep.mubr.bf16.mxu0 0
        %1128 = vmatmul.mubr.bf16.gmra.mrb[0].mxu0 %v1048
        %v1129 = vpop.f32.mrb[0].mxu0
        %v1130 = vadd.f32 %v1020, %v1129
        %v1131 = vpop.f32.mrb[0].mxu0
        %v1132 = vpop.f32.mrb[0].mxu0
        %v1133 = vadd.f32 %v1020, %v1132
        %v1134 = vpop.f32.mrb[0].mxu0
        %1135 = vmatprep.mubr.bf16.mxu0 0
        %1136 = vmatmul.mubr.bf16.gmra.mrb[0].mxu0 %v1051
        %v1137 = vpop.f32.mrb[0].mxu0
        %v1138 = vadd.f32 %v1020, %v1137
        %v1139 = vpop.f32.mrb[0].mxu0
        %v1140 = vpop.f32.mrb[0].mxu0
        %v1141 = vadd.f32 %v1020, %v1140
        %v1142 = vpop.f32.mrb[0].mxu0
        %1143 = vmatprep.mubr.bf16.mxu0 0
        %1144 = vmatmul.mubr.bf16.gmra.mrb[0].mxu0 %v1054
        %v1145 = vpop.f32.mrb[0].mxu0
        %v1146 = vadd.f32 %v1020, %v1145
        %v1147 = vpop.f32.mrb[0].mxu0
        %v1148 = vpop.f32.mrb[0].mxu0
        %v1149 = vadd.f32 %v1020, %v1148
        %v1150 = vpop.f32.mrb[0].mxu0
        %1151 = vmatprep.mubr.bf16.mxu0 0
        %1152 = vmatmul.mubr.bf16.gmra.mrb[0].mxu0 %v1057
        %v1153 = vpop.f32.mrb[0].mxu0
        %v1154 = vadd.f32 %v1020, %v1153
        %v1155 = vpop.f32.mrb[0].mxu0
        %v1156 = vpop.f32.mrb[0].mxu0
        %v1157 = vadd.f32 %v1020, %v1156
        %v1158 = vpop.f32.mrb[0].mxu0
        %1159 = vmatprep.mubr.bf16.mxu0 0
        %1160 = vmatmul.mubr.bf16.gmra.mrb[0].mxu0 %v1060
        %v1161 = vpop.f32.mrb[0].mxu0
        %v1162 = vadd.f32 %v1020, %v1161
        %v1163 = vpop.f32.mrb[0].mxu0
        %v1164 = vpop.f32.mrb[0].mxu0
        %v1165 = vadd.f32 %v1020, %v1164
        %v1166 = vpop.f32.mrb[0].mxu0
        %1167 = vmatprep.mubr.bf16.mxu0 0
        %1168 = vmatmul.mubr.bf16.gmra.mrb[0].mxu0 %v1063
        %v1169 = vpop.f32.mrb[0].mxu0
        %v1170 = vadd.f32 %v1020, %v1169
        %v1171 = vpop.f32.mrb[0].mxu0
        %v1172 = vpop.f32.mrb[0].mxu0
        %v1173 = vadd.f32 %v1020, %v1172
        %v1174 = vpop.f32.mrb[0].mxu0
        %1175 = vmatprep.mubr.bf16.mxu0 0
        %1176 = vmatmul.mubr.bf16.gmra.mrb[0].mxu0 %v1066
        %v1177 = vpop.f32.mrb[0].mxu0
        %v1178 = vadd.f32 %v1020, %v1177
        %v1179 = vpop.f32.mrb[0].mxu0
        %v1180 = vpop.f32.mrb[0].mxu0
        %v1181 = vadd.f32 %v1020, %v1180
        %v1182 = vpop.f32.mrb[0].mxu0
        %1183 = vmatprep.mubr.bf16.mxu0 0
        %1184 = vmatmul.mubr.bf16.gmra.mrb[0].mxu0 %v1069
        %v1185 = vpop.f32.mrb[0].mxu0
        %v1186 = vadd.f32 %v1020, %v1185
        %v1187 = vpop.f32.mrb[0].mxu0
        %v1188 = vpop.f32.mrb[0].mxu0
        %v1189 = vadd.f32 %v1020, %v1188
        %v1190 = vpop.f32.mrb[0].mxu0
        %1191 = vmatprep.mubr.bf16.mxu0 0
        %1192 = vmatmul.mubr.bf16.gmra.mrb[0].mxu0 %v1072
        %v1193 = vpop.f32.mrb[0].mxu0
        %v1194 = vadd.f32 %v1020, %v1193
        %v1195 = vpop.f32.mrb[0].mxu0
        %v1196 = vpop.f32.mrb[0].mxu0
        %v1197 = vadd.f32 %v1020, %v1196
        %v1198 = vpop.f32.mrb[0].mxu0
        %1199 = vmatprep.mubr.bf16.mxu0 0
        %1200 = vmatmul.mubr.bf16.gmra.mrb[0].mxu0 %v1075
        %v1201 = vpop.f32.mrb[0].mxu0
        %v1202 = vadd.f32 %v1020, %v1201
        %v1203 = vpop.f32.mrb[0].mxu0
        %v1204 = vpop.f32.mrb[0].mxu0
        %v1205 = vadd.f32 %v1020, %v1204
        %v1206 = vpop.f32.mrb[0].mxu0
        %1207 = vmatprep.mubr.bf16.mxu0 0
        %1208 = vmatmul.mubr.bf16.gmra.mrb[0].mxu0 %v1078
        %v1209 = vpop.f32.mrb[0].mxu0
        %v1210 = vadd.f32 %v1020, %v1209
        %v1211 = vpop.f32.mrb[0].mxu0
        %v1212 = vpop.f32.mrb[0].mxu0
        %v1213 = vadd.f32 %v1020, %v1212
        %v1214 = vpop.f32.mrb[0].mxu0
        %1215 = vmatprep.mubr.bf16.mxu0 0
        %1216 = vmatmul.mubr.bf16.gmra.mrb[0].mxu0 %v1081
        %v1217 = vpop.f32.mrb[0].mxu0
        %v1218 = vadd.f32 %v1020, %v1217
        %v1219 = vpop.f32.mrb[0].mxu0
        %v1220 = vpop.f32.mrb[0].mxu0
        %v1221 = vadd.f32 %v1020, %v1220
        %v1222 = vpop.f32.mrb[0].mxu0
        %1223 = vmatprep.mubr.bf16.mxu0 0
        %1224 = vmatmul.mubr.bf16.gmra.mrb[0].mxu0 %v1084
        %v1225 = vpop.f32.mrb[0].mxu0
        %v1226 = vadd.f32 %v1020, %v1225
        %v1227 = vpop.f32.mrb[0].mxu0
        %v1228 = vpop.f32.mrb[0].mxu0
        %v1229 = vadd.f32 %v1020, %v1228
        %v1230 = vpop.f32.mrb[0].mxu0
        %1231 = vmatprep.mubr.bf16.mxu0 0
        %1232 = vmatmul.mubr.bf16.gmra.mrb[0].mxu0 %v1087
        %v1233 = vpop.f32.mrb[0].mxu0
        %v1234 = vadd.f32 %v1020, %v1233
        %v1235 = vpop.f32.mrb[0].mxu0
        %v1236 = vpop.f32.mrb[0].mxu0
        %v1237 = vadd.f32 %v1020, %v1236
        %v1238 = vpop.f32.mrb[0].mxu0
        %1239 = vmatprep.mubr.bf16.mxu0 0
        %1240 = vmatmul.mubr.bf16.gmra.mrb[0].mxu0 %v1090
        %v1241 = vpop.f32.mrb[0].mxu0
        %v1242 = vadd.f32 %v1020, %v1241
        %v1243 = vpop.f32.mrb[0].mxu0
        %v1244 = vpop.f32.mrb[0].mxu0
        %v1245 = vadd.f32 %v1020, %v1244
        %v1246 = vpop.f32.mrb[0].mxu0
        %1247 = vmatprep.mubr.bf16.mxu0 0
        %1248 = vmatmul.mubr.bf16.gmra.mrb[0].mxu0 %v1093
        %v1249 = vpop.f32.mrb[0].mxu0
        %v1250 = vadd.f32 %v1020, %v1249
        %v1251 = vpop.f32.mrb[0].mxu0
        %v1252 = vpop.f32.mrb[0].mxu0
        %v1253 = vadd.f32 %v1020, %v1252
        %v1254 = vpop.f32.mrb[0].mxu0
        %1255 = vdwg.mxu0
        %v1256 = vmax.f32 %v1130, 0.0
        %v1257 = vmax.f32 %v1133, 0.0
        %v1258 = vmax.f32 %v1138, 0.0
        %v1259 = vmax.f32 %v1141, 0.0
        %v1260 = vmax.f32 %v1146, 0.0
        %v1261 = vmax.f32 %v1149, 0.0
        %v1262 = vmax.f32 %v1154, 0.0
        %v1263 = vmax.f32 %v1157, 0.0
        %v1264 = vmax.f32 %v1162, 0.0
        %v1265 = vmax.f32 %v1165, 0.0
        %v1266 = vmax.f32 %v1170, 0.0
        %v1267 = vmax.f32 %v1173, 0.0
        %v1268 = vmax.f32 %v1178, 0.0
        %v1269 = vmax.f32 %v1181, 0.0
        %v1270 = vmax.f32 %v1186, 0.0
        %v1271 = vmax.f32 %v1189, 0.0
        %v1272 = vmax.f32 %v1194, 0.0
        %v1273 = vmax.f32 %v1197, 0.0
        %v1274 = vmax.f32 %v1202, 0.0
        %v1275 = vmax.f32 %v1205, 0.0
        %v1276 = vmax.f32 %v1210, 0.0
        %v1277 = vmax.f32 %v1213, 0.0
        %v1278 = vmax.f32 %v1218, 0.0
        %v1279 = vmax.f32 %v1221, 0.0
        %v1280 = vmax.f32 %v1226, 0.0
        %v1281 = vmax.f32 %v1229, 0.0
        %v1282 = vmax.f32 %v1234, 0.0
        %v1283 = vmax.f32 %v1237, 0.0
        %v1284 = vmax.f32 %v1242, 0.0
        %v1285 = vmax.f32 %v1245, 0.0
        %v1286 = vmax.f32 %v1250, 0.0
        %v1287 = vmax.f32 %v1253, 0.0
        %1288 = vst.msk [vmem:[#allocation2] sm:$0xff] %vm1046, %v1256
        %1289 = vst.msk [vmem:[#allocation2 + $0x8] sm:$0xff] %vm1046, %v1257
        %1290 = vst.msk [vmem:[#allocation2 + $0x10] sm:$0xff] %vm1046, %v1258
        %1291 = vst.msk [vmem:[#allocation2 + $0x18] sm:$0xff] %vm1046, %v1259
        %1292 = vst.msk [vmem:[#allocation2 + $0x20] sm:$0xff] %vm1046, %v1260
        %1293 = vst.msk [vmem:[#allocation2 + $0x28] sm:$0xff] %vm1046, %v1261
        %1294 = vst.msk [vmem:[#allocation2 + $0x30] sm:$0xff] %vm1046, %v1262
        %1295 = vst.msk [vmem:[#allocation2 + $0x38] sm:$0xff] %vm1046, %v1263
        %1296 = vst.msk [vmem:[#allocation2 + $0x40] sm:$0xff] %vm1046, %v1264
        %1297 = vst.msk [vmem:[#allocation2 + $0x48] sm:$0xff] %vm1046, %v1265
        %1298 = vst.msk [vmem:[#allocation2 + $0x50] sm:$0xff] %vm1046, %v1266
        %1299 = vst.msk [vmem:[#allocation2 + $0x58] sm:$0xff] %vm1046, %v1267
        %1300 = vst.msk [vmem:[#allocation2 + $0x60] sm:$0xff] %vm1046, %v1268
        %1301 = vst.msk [vmem:[#allocation2 + $0x68] sm:$0xff] %vm1046, %v1269
        %1302 = vst.msk [vmem:[#allocation2 + $0x70] sm:$0xff] %vm1046, %v1270
        %1303 = vst.msk [vmem:[#allocation2 + $0x78] sm:$0xff] %vm1046, %v1271
        %1304 = vst.msk [vmem:[#allocation2 + $0x80] sm:$0xff] %vm1046, %v1272
        %1305 = vst.msk [vmem:[#allocation2 + $0x88] sm:$0xff] %vm1046, %v1273
        %1306 = vst.msk [vmem:[#allocation2 + $0x90] sm:$0xff] %vm1046, %v1274
        %1307 = vst.msk [vmem:[#allocation2 + $0x98] sm:$0xff] %vm1046, %v1275
        %1308 = vst.msk [vmem:[#allocation2 + $0xa0] sm:$0xff] %vm1046, %v1276
        %1309 = vst.msk [vmem:[#allocation2 + $0xa8] sm:$0xff] %vm1046, %v1277
        %1310 = vst.msk [vmem:[#allocation2 + $0xb0] sm:$0xff] %vm1046, %v1278
        %1311 = vst.msk [vmem:[#allocation2 + $0xb8] sm:$0xff] %vm1046, %v1279
        %1312 = vst.msk [vmem:[#allocation2 + $0xc0] sm:$0xff] %vm1046, %v1280
        %1313 = vst.msk [vmem:[#allocation2 + $0xc8] sm:$0xff] %vm1046, %v1281
        %1314 = vst.msk [vmem:[#allocation2 + $0xd0] sm:$0xff] %vm1046, %v1282
        %1315 = vst.msk [vmem:[#allocation2 + $0xd8] sm:$0xff] %vm1046, %v1283
        %1316 = vst.msk [vmem:[#allocation2 + $0xe0] sm:$0xff] %vm1046, %v1284
        %1317 = vst.msk [vmem:[#allocation2 + $0xe8] sm:$0xff] %vm1046, %v1285
        %1318 = vst.msk [vmem:[#allocation2 + $0xf0] sm:$0xff] %vm1046, %v1286
        %1319 = vst.msk [vmem:[#allocation2 + $0xf8] sm:$0xff] %vm1046, %v1287
        %s1320 = sshra.s32 %s316, 3
        %s1321 = sand.u32 %s316, 7
        %s1322 = smul.u32 %s1320, 2
        %s1323 = smul.addr %s1322, 4
        %s1324 = scalar_lea.vmem [#allocation3], %s1323
        %v1325 = vld [vmem:[%s1324] sm:$0xff]
        %v1326 = vld [vmem:[%s1324 + $0x8] sm:$0xff]
        %v1327 = vld [vmem:[%s1324 + $0x10] sm:$0xff]
        %v1328 = vld [vmem:[%s1324 + $0x18] sm:$0xff]
        %v1329 = vld [vmem:[%s1324 + $0x20] sm:$0xff]
        %v1330 = vld [vmem:[%s1324 + $0x28] sm:$0xff]
        %v1331 = vld [vmem:[%s1324 + $0x30] sm:$0xff]
        %v1332 = vld [vmem:[%s1324 + $0x38] sm:$0xff]
        %v1333 = vld [vmem:[%s1324 + $0x40] sm:$0xff]
        %v1334 = vld [vmem:[%s1324 + $0x48] sm:$0xff]
        %v1335 = vld [vmem:[%s1324 + $0x50] sm:$0xff]
        %v1336 = vld [vmem:[%s1324 + $0x58] sm:$0xff]
        %v1337 = vld [vmem:[%s1324 + $0x60] sm:$0xff]
        %v1338 = vld [vmem:[%s1324 + $0x68] sm:$0xff]
        %v1339 = vld [vmem:[%s1324 + $0x70] sm:$0xff]
        %v1340 = vld [vmem:[%s1324 + $0x78] sm:$0xff]
        %v1341 = vpack.c.bf16 %v1257, %v1256
        %v1342 = vpack.c.bf16 %v1259, %v1258
        %v1343 = vpack.c.bf16 %v1261, %v1260
        %v1344 = vpack.c.bf16 %v1263, %v1262
        %v1345 = vpack.c.bf16 %v1265, %v1264
        %v1346 = vpack.c.bf16 %v1267, %v1266
        %v1347 = vpack.c.bf16 %v1269, %v1268
        %v1348 = vpack.c.bf16 %v1271, %v1270
        %v1349 = vpack.c.bf16 %v1273, %v1272
        %v1350 = vpack.c.bf16 %v1275, %v1274
        %v1351 = vpack.c.bf16 %v1277, %v1276
        %v1352 = vpack.c.bf16 %v1279, %v1278
        %v1353 = vpack.c.bf16 %v1281, %v1280
        %v1354 = vpack.c.bf16 %v1283, %v1282
        %v1355 = vpack.c.bf16 %v1285, %v1284
        %v1356 = vpack.c.bf16 %v1287, %v1286
        %v1373 = vunpack.c.l.b16 %v1325
        %v1374 = vunpack.c.h.b16 %v1325
        %v1375 = vunpack.c.l.b16 %v1326
        %v1376 = vunpack.c.h.b16 %v1326
        %v1377 = vunpack.c.l.b16 %v1327
        %v1378 = vunpack.c.h.b16 %v1327
        %v1379 = vunpack.c.l.b16 %v1328
        %v1380 = vunpack.c.h.b16 %v1328
        %v1381 = vunpack.c.l.b16 %v1329
        %v1382 = vunpack.c.h.b16 %v1329
        %v1383 = vunpack.c.l.b16 %v1330
        %v1384 = vunpack.c.h.b16 %v1330
        %v1385 = vunpack.c.l.b16 %v1331
        %v1386 = vunpack.c.h.b16 %v1331
        %v1387 = vunpack.c.l.b16 %v1332
        %v1388 = vunpack.c.h.b16 %v1332
        %v1389 = vunpack.c.l.b16 %v1333
        %v1390 = vunpack.c.h.b16 %v1333
        %v1391 = vunpack.c.l.b16 %v1334
        %v1392 = vunpack.c.h.b16 %v1334
        %v1393 = vunpack.c.l.b16 %v1335
        %v1394 = vunpack.c.h.b16 %v1335
        %v1395 = vunpack.c.l.b16 %v1336
        %v1396 = vunpack.c.h.b16 %v1336
        %v1397 = vunpack.c.l.b16 %v1337
        %v1398 = vunpack.c.h.b16 %v1337
        %v1399 = vunpack.c.l.b16 %v1338
        %v1400 = vunpack.c.h.b16 %v1338
        %v1401 = vunpack.c.l.b16 %v1339
        %v1402 = vunpack.c.h.b16 %v1339
        %v1403 = vunpack.c.l.b16 %v1340
        %v1404 = vunpack.c.h.b16 %v1340
        %v1405 = vpack.c.b16 %v1375, %v1373
        %v1406 = vpack.c.b16 %v1376, %v1374
        %v1407 = vpack.c.b16 %v1379, %v1377
        %v1408 = vpack.c.b16 %v1380, %v1378
        %v1409 = vpack.c.b16 %v1383, %v1381
        %v1410 = vpack.c.b16 %v1384, %v1382
        %v1411 = vpack.c.b16 %v1387, %v1385
        %v1412 = vpack.c.b16 %v1388, %v1386
        %v1413 = vpack.c.b16 %v1391, %v1389
        %v1414 = vpack.c.b16 %v1392, %v1390
        %v1415 = vpack.c.b16 %v1395, %v1393
        %v1416 = vpack.c.b16 %v1396, %v1394
        %v1417 = vpack.c.b16 %v1399, %v1397
        %v1418 = vpack.c.b16 %v1400, %v1398
        %v1419 = vpack.c.b16 %v1403, %v1401
        %v1420 = vpack.c.b16 %v1404, %v1402
        %1437 = vmatprep.subr.bf16.mxu0 0
        %1438 = vmatpush1.bf16.msra.mxu0 %v1341
        %1439 = vmatprep.subr.bf16.mxu0 0
        %1440 = vmatpush1.bf16.msra.mxu0 %v1342
        %1441 = vmatprep.subr.bf16.mxu0 0
        %1442 = vmatpush1.bf16.msra.mxu0 %v1343
        %1443 = vmatprep.subr.bf16.mxu0 0
        %1444 = vmatpush1.bf16.msra.mxu0 %v1344
        %1445 = vmatprep.subr.bf16.mxu0 0
        %1446 = vmatpush1.bf16.msra.mxu0 %v1345
        %1447 = vmatprep.subr.bf16.mxu0 0
        %1448 = vmatpush1.bf16.msra.mxu0 %v1346
        %1449 = vmatprep.subr.bf16.mxu0 0
        %1450 = vmatpush1.bf16.msra.mxu0 %v1347
        %1451 = vmatprep.subr.bf16.mxu0 0
        %1452 = vmatpush1.bf16.msra.mxu0 %v1348
        %1453 = vmatprep.subr.bf16.mxu0 0
        %1454 = vmatpush1.bf16.msra.mxu0 %v1349
        %1455 = vmatprep.subr.bf16.mxu0 0
        %1456 = vmatpush1.bf16.msra.mxu0 %v1350
        %1457 = vmatprep.subr.bf16.mxu0 0
        %1458 = vmatpush1.bf16.msra.mxu0 %v1351
        %1459 = vmatprep.subr.bf16.mxu0 0
        %1460 = vmatpush1.bf16.msra.mxu0 %v1352
        %1461 = vmatprep.subr.bf16.mxu0 0
        %1462 = vmatpush1.bf16.msra.mxu0 %v1353
        %1463 = vmatprep.subr.bf16.mxu0 0
        %1464 = vmatpush1.bf16.msra.mxu0 %v1354
        %1465 = vmatprep.subr.bf16.mxu0 0
        %1466 = vmatpush1.bf16.msra.mxu0 %v1355
        %1467 = vmatprep.subr.bf16.mxu0 0
        %1468 = vmatpush1.bf16.msra.mxu0 %v1356
        %1469 = vmatprep.mubr.bf16.mxu0 %v1406
        %1470 = vmatmul.mubr.bf16.gmra.mrb[0].mxu0 %v1405
        %v1471 = vpop.f32.mrb[0].mxu0
        %v1472 = vadd.f32 0.0, %v1471
        %v1473 = vpop.f32.mrb[0].mxu0
        %v1474 = vpop.f32.mrb[0].mxu0
        %v1475 = vadd.f32 0.0, %v1474
        %v1476 = vpop.f32.mrb[0].mxu0
        %1477 = vmatprep.mubr.bf16.mxu0 %v1408
        %1478 = vmatmul.mubr.bf16.gmra.mrb[0].mxu0 %v1407
        %v1479 = vpop.f32.mrb[0].mxu0
        %v1480 = vadd.f32 0.0, %v1479
        %v1481 = vpop.f32.mrb[0].mxu0
        %v1482 = vpop.f32.mrb[0].mxu0
        %v1483 = vadd.f32 0.0, %v1482
        %v1484 = vpop.f32.mrb[0].mxu0
        %1485 = vmatprep.mubr.bf16.mxu0 %v1410
        %1486 = vmatmul.mubr.bf16.gmra.mrb[0].mxu0 %v1409
        %v1487 = vpop.f32.mrb[0].mxu0
        %v1488 = vadd.f32 0.0, %v1487
        %v1489 = vpop.f32.mrb[0].mxu0
        %v1490 = vpop.f32.mrb[0].mxu0
        %v1491 = vadd.f32 0.0, %v1490
        %v1492 = vpop.f32.mrb[0].mxu0
        %1493 = vmatprep.mubr.bf16.mxu0 %v1412
        %1494 = vmatmul.mubr.bf16.gmra.mrb[0].mxu0 %v1411
        %v1495 = vpop.f32.mrb[0].mxu0
        %v1496 = vadd.f32 0.0, %v1495
        %v1497 = vpop.f32.mrb[0].mxu0
        %v1498 = vpop.f32.mrb[0].mxu0
        %v1499 = vadd.f32 0.0, %v1498
        %v1500 = vpop.f32.mrb[0].mxu0
        %1501 = vmatprep.mubr.bf16.mxu0 %v1414
        %1502 = vmatmul.mubr.bf16.gmra.mrb[0].mxu0 %v1413
        %v1503 = vpop.f32.mrb[0].mxu0
        %v1504 = vadd.f32 0.0, %v1503
        %v1505 = vpop.f32.mrb[0].mxu0
        %v1506 = vpop.f32.mrb[0].mxu0
        %v1507 = vadd.f32 0.0, %v1506
        %v1508 = vpop.f32.mrb[0].mxu0
        %1509 = vmatprep.mubr.bf16.mxu0 %v1416
        %1510 = vmatmul.mubr.bf16.gmra.mrb[0].mxu0 %v1415
        %v1511 = vpop.f32.mrb[0].mxu0
        %v1512 = vadd.f32 0.0, %v1511
        %v1513 = vpop.f32.mrb[0].mxu0
        %v1514 = vpop.f32.mrb[0].mxu0
        %v1515 = vadd.f32 0.0, %v1514
        %v1516 = vpop.f32.mrb[0].mxu0
        %1517 = vmatprep.mubr.bf16.mxu0 %v1418
        %1518 = vmatmul.mubr.bf16.gmra.mrb[0].mxu0 %v1417
        %v1519 = vpop.f32.mrb[0].mxu0
        %v1520 = vadd.f32 0.0, %v1519
        %v1521 = vpop.f32.mrb[0].mxu0
        %v1522 = vpop.f32.mrb[0].mxu0
        %v1523 = vadd.f32 0.0, %v1522
        %v1524 = vpop.f32.mrb[0].mxu0
        %1525 = vmatprep.mubr.bf16.mxu0 %v1420
        %1526 = vmatmul.mubr.bf16.gmra.mrb[0].mxu0 %v1419
        %v1527 = vpop.f32.mrb[0].mxu0
        %v1528 = vadd.f32 0.0, %v1527
        %v1529 = vpop.f32.mrb[0].mxu0
        %v1530 = vpop.f32.mrb[0].mxu0
        %v1531 = vadd.f32 0.0, %v1530
        %v1532 = vpop.f32.mrb[0].mxu0
        %1533 = vdwg.mxu0
        %s1534 = scalar_lea.vmem [#allocation2], %s316
        %v1535 = vld [vmem:[%s1534] sm:$0xff]
        %v1536 = vld [vmem:[%s1534 + $0x8] sm:$0xff]
        %v1537 = vld [vmem:[%s1534 + $0x10] sm:$0xff]
        %v1538 = vld [vmem:[%s1534 + $0x18] sm:$0xff]
        %v1539 = vld [vmem:[%s1534 + $0x20] sm:$0xff]
        %v1540 = vld [vmem:[%s1534 + $0x28] sm:$0xff]
        %v1541 = vld [vmem:[%s1534 + $0x30] sm:$0xff]
        %v1542 = vld [vmem:[%s1534 + $0x38] sm:$0xff]
        %v1543 = vld [vmem:[%s1534 + $0x40] sm:$0xff]
        %v1544 = vld [vmem:[%s1534 + $0x48] sm:$0xff]
        %v1545 = vld [vmem:[%s1534 + $0x50] sm:$0xff]
        %v1546 = vld [vmem:[%s1534 + $0x58] sm:$0xff]
        %v1547 = vld [vmem:[%s1534 + $0x60] sm:$0xff]
        %v1548 = vld [vmem:[%s1534 + $0x68] sm:$0xff]
        %v1549 = vld [vmem:[%s1534 + $0x70] sm:$0xff]
        %v1550 = vld [vmem:[%s1534 + $0x78] sm:$0xff]
        %1567 = vrot.lane.b32.xlu0 %v1472, 64
        %v1568 = vpop.permute.xlu0 %1567
        %1569 = vrot.lane.b32.xlu0 %v1475, 64
        %v1570 = vpop.permute.xlu0 %1569
        %1571 = vrot.lane.b32.xlu0 %v1480, 64
        %v1572 = vpop.permute.xlu0 %1571
        %1573 = vrot.lane.b32.xlu0 %v1483, 64
        %v1574 = vpop.permute.xlu0 %1573
        %1575 = vrot.lane.b32.xlu0 %v1488, 64
        %v1576 = vpop.permute.xlu0 %1575
        %1577 = vrot.lane.b32.xlu0 %v1491, 64
        %v1578 = vpop.permute.xlu0 %1577
        %1579 = vrot.lane.b32.xlu0 %v1496, 64
        %v1580 = vpop.permute.xlu0 %1579
        %1581 = vrot.lane.b32.xlu0 %v1499, 64
        %v1582 = vpop.permute.xlu0 %1581
        %1583 = vrot.lane.b32.xlu0 %v1504, 64
        %v1584 = vpop.permute.xlu0 %1583
        %1585 = vrot.lane.b32.xlu0 %v1507, 64
        %v1586 = vpop.permute.xlu0 %1585
        %1587 = vrot.lane.b32.xlu0 %v1512, 64
        %v1588 = vpop.permute.xlu0 %1587
        %1589 = vrot.lane.b32.xlu0 %v1515, 64
        %v1590 = vpop.permute.xlu0 %1589
        %1591 = vrot.lane.b32.xlu0 %v1520, 64
        %v1592 = vpop.permute.xlu0 %1591
        %1593 = vrot.lane.b32.xlu0 %v1523, 64
        %v1594 = vpop.permute.xlu0 %1593
        %1595 = vrot.lane.b32.xlu0 %v1528, 64
        %v1596 = vpop.permute.xlu0 %1595
        %1597 = vrot.lane.b32.xlu0 %v1531, 64
        %v1598 = vpop.permute.xlu0 %1597
        %v1615 = vsel %vm1046, %v1535, %v1568
        %v1616 = vsel %vm1046, %v1536, %v1570
        %v1617 = vsel %vm1046, %v1537, %v1572
        %v1618 = vsel %vm1046, %v1538, %v1574
        %v1619 = vsel %vm1046, %v1539, %v1576
        %v1620 = vsel %vm1046, %v1540, %v1578
        %v1621 = vsel %vm1046, %v1541, %v1580
        %v1622 = vsel %vm1046, %v1542, %v1582
        %v1623 = vsel %vm1046, %v1543, %v1584
        %v1624 = vsel %vm1046, %v1544, %v1586
        %v1625 = vsel %vm1046, %v1545, %v1588
        %v1626 = vsel %vm1046, %v1546, %v1590
        %v1627 = vsel %vm1046, %v1547, %v1592
        %v1628 = vsel %vm1046, %v1548, %v1594
        %v1629 = vsel %vm1046, %v1549, %v1596
        %v1630 = vsel %vm1046, %v1550, %v1598
        %v1631 = vpack.c.bf16 %v1616, %v1615
        %v1632 = vpack.c.bf16 %v1618, %v1617
        %v1633 = vpack.c.bf16 %v1620, %v1619
        %v1634 = vpack.c.bf16 %v1622, %v1621
        %v1635 = vpack.c.bf16 %v1624, %v1623
        %v1636 = vpack.c.bf16 %v1626, %v1625
        %v1637 = vpack.c.bf16 %v1628, %v1627
        %v1638 = vpack.c.bf16 %v1630, %v1629
        %v1639 = vld [vmem:[#allocation11] sm:$0xf]
        %v1640 = vld [vmem:[#allocation11 + $0x4] sm:$0xf]
        %v1641 = vld [vmem:[#allocation11 + $0x8] sm:$0xf]
        %v1642 = vld [vmem:[#allocation11 + $0xc] sm:$0xf]
        %v1643 = vld [vmem:[#allocation11 + $0x10] sm:$0xf]
        %v1644 = vld [vmem:[#allocation11 + $0x14] sm:$0xf]
        %v1645 = vld [vmem:[#allocation11 + $0x18] sm:$0xf]
        %v1646 = vld [vmem:[#allocation11 + $0x1c] sm:$0xf]
        %v1647 = vld [vmem:[#allocation11 + $0x20] sm:$0xf]
        %v1648 = vld [vmem:[#allocation11 + $0x24] sm:$0xf]
        %v1649 = vld [vmem:[#allocation11 + $0x28] sm:$0xf]
        %v1650 = vld [vmem:[#allocation11 + $0x2c] sm:$0xf]
        %v1651 = vld [vmem:[#allocation11 + $0x30] sm:$0xf]
        %v1652 = vld [vmem:[#allocation11 + $0x34] sm:$0xf]
        %v1653 = vld [vmem:[#allocation11 + $0x38] sm:$0xf]
        %v1654 = vld [vmem:[#allocation11 + $0x3c] sm:$0xf]
        %v1655 = vld [vmem:[#allocation12] sm:$0x1]
        %v1657 = vlaneseq
        %v1658 = vshrl.u32 %v1657, 7
        %v1659 = vsub.s32 0, %v1658
        %v1660 = vrot.slane %v1655, %v1659
        %v1678 = vunpack.c.l.b16 %v1639
        %v1679 = vunpack.c.l.b16 %v1640
        %v1680 = vunpack.c.l.b16 %v1641
        %v1681 = vunpack.c.l.b16 %v1642
        %v1682 = vunpack.c.l.b16 %v1643
        %v1683 = vunpack.c.l.b16 %v1644
        %v1684 = vunpack.c.l.b16 %v1645
        %v1685 = vunpack.c.l.b16 %v1646
        %v1686 = vunpack.c.l.b16 %v1647
        %v1687 = vunpack.c.l.b16 %v1648
        %v1688 = vunpack.c.l.b16 %v1649
        %v1689 = vunpack.c.l.b16 %v1650
        %v1690 = vunpack.c.l.b16 %v1651
        %v1691 = vunpack.c.l.b16 %v1652
        %v1692 = vunpack.c.l.b16 %v1653
        %v1693 = vunpack.c.l.b16 %v1654
        %v1694 = vpack.c.b16 %v1679, %v1678
        %v1695 = vpack.c.b16 %v1681, %v1680
        %v1696 = vpack.c.b16 %v1683, %v1682
        %v1697 = vpack.c.b16 %v1685, %v1684
        %v1698 = vpack.c.b16 %v1687, %v1686
        %v1699 = vpack.c.b16 %v1689, %v1688
        %v1700 = vpack.c.b16 %v1691, %v1690
        %v1701 = vpack.c.b16 %v1693, %v1692
        %1710 = vmatprep.subr.bf16.mxu0 0
        %1711 = vmatpush1.bf16.msra.mxu0 %v1694
        %1712 = vmatprep.subr.bf16.mxu0 0
        %1713 = vmatpush1.bf16.msra.mxu0 %v1695
        %1714 = vmatprep.subr.bf16.mxu0 0
        %1715 = vmatpush1.bf16.msra.mxu0 %v1696
        %1716 = vmatprep.subr.bf16.mxu0 0
        %1717 = vmatpush1.bf16.msra.mxu0 %v1697
        %1718 = vmatprep.subr.bf16.mxu0 0
        %1719 = vmatpush1.bf16.msra.mxu0 %v1698
        %1720 = vmatprep.subr.bf16.mxu0 0
        %1721 = vmatpush1.bf16.msra.mxu0 %v1699
        %1722 = vmatprep.subr.bf16.mxu0 0
        %1723 = vmatpush1.bf16.msra.mxu0 %v1700
        %1724 = vmatprep.subr.bf16.mxu0 0
        %1725 = vmatpush1.bf16.msra.mxu0 %v1701
        %1726 = vmatprep.subr.bf16.mxu0 0
        %1727 = vmatpush1.bf16.msra.mxu0 0
        %1728 = vmatprep.subr.bf16.mxu0 0
        %1729 = vmatpush1.bf16.msra.mxu0 0
        %1730 = vmatprep.subr.bf16.mxu0 0
        %1731 = vmatpush1.bf16.msra.mxu0 0
        %1732 = vmatprep.subr.bf16.mxu0 0
        %1733 = vmatpush1.bf16.msra.mxu0 0
        %1734 = vmatprep.subr.bf16.mxu0 0
        %1735 = vmatpush1.bf16.msra.mxu0 0
        %1736 = vmatprep.subr.bf16.mxu0 0
        %1737 = vmatpush1.bf16.msra.mxu0 0
        %1738 = vmatprep.subr.bf16.mxu0 0
        %1739 = vmatpush1.bf16.msra.mxu0 0
        %1740 = vmatprep.subr.bf16.mxu0 0
        %1741 = vmatpush1.bf16.msra.mxu0 0
        %1742 = vmatprep.mubr.bf16.mxu0 0
        %1743 = vmatmul.mubr.bf16.gmra.mrb[0].mxu0 %v1631
        %v1744 = vpop.f32.mrb[0].mxu0
        %v1745 = vadd.f32 %v1660, %v1744
        %v1746 = vpop.f32.mrb[0].mxu0
        %v1747 = vpop.f32.mrb[0].mxu0
        %v1748 = vadd.f32 %v1660, %v1747
        %v1749 = vpop.f32.mrb[0].mxu0
        %1750 = vmatprep.mubr.bf16.mxu0 0
        %1751 = vmatmul.mubr.bf16.gmra.mrb[0].mxu0 %v1632
        %v1752 = vpop.f32.mrb[0].mxu0
        %v1753 = vadd.f32 %v1660, %v1752
        %v1754 = vpop.f32.mrb[0].mxu0
        %v1755 = vpop.f32.mrb[0].mxu0
        %v1756 = vadd.f32 %v1660, %v1755
        %v1757 = vpop.f32.mrb[0].mxu0
        %1758 = vmatprep.mubr.bf16.mxu0 0
        %1759 = vmatmul.mubr.bf16.gmra.mrb[0].mxu0 %v1633
        %v1760 = vpop.f32.mrb[0].mxu0
        %v1761 = vadd.f32 %v1660, %v1760
        %v1762 = vpop.f32.mrb[0].mxu0
        %v1763 = vpop.f32.mrb[0].mxu0
        %v1764 = vadd.f32 %v1660, %v1763
        %v1765 = vpop.f32.mrb[0].mxu0
        %1766 = vmatprep.mubr.bf16.mxu0 0
        %1767 = vmatmul.mubr.bf16.gmra.mrb[0].mxu0 %v1634
        %v1768 = vpop.f32.mrb[0].mxu0
        %v1769 = vadd.f32 %v1660, %v1768
        %v1770 = vpop.f32.mrb[0].mxu0
        %v1771 = vpop.f32.mrb[0].mxu0
        %v1772 = vadd.f32 %v1660, %v1771
        %v1773 = vpop.f32.mrb[0].mxu0
        %1774 = vmatprep.mubr.bf16.mxu0 0
        %1775 = vmatmul.mubr.bf16.gmra.mrb[0].mxu0 %v1635
        %v1776 = vpop.f32.mrb[0].mxu0
        %v1777 = vadd.f32 %v1660, %v1776
        %v1778 = vpop.f32.mrb[0].mxu0
        %v1779 = vpop.f32.mrb[0].mxu0
        %v1780 = vadd.f32 %v1660, %v1779
        %v1781 = vpop.f32.mrb[0].mxu0
        %1782 = vmatprep.mubr.bf16.mxu0 0
        %1783 = vmatmul.mubr.bf16.gmra.mrb[0].mxu0 %v1636
        %v1784 = vpop.f32.mrb[0].mxu0
        %v1785 = vadd.f32 %v1660, %v1784
        %v1786 = vpop.f32.mrb[0].mxu0
        %v1787 = vpop.f32.mrb[0].mxu0
        %v1788 = vadd.f32 %v1660, %v1787
        %v1789 = vpop.f32.mrb[0].mxu0
        %1790 = vmatprep.mubr.bf16.mxu0 0
        %1791 = vmatmul.mubr.bf16.gmra.mrb[0].mxu0 %v1637
        %v1792 = vpop.f32.mrb[0].mxu0
        %v1793 = vadd.f32 %v1660, %v1792
        %v1794 = vpop.f32.mrb[0].mxu0
        %v1795 = vpop.f32.mrb[0].mxu0
        %v1796 = vadd.f32 %v1660, %v1795
        %v1797 = vpop.f32.mrb[0].mxu0
        %1798 = vmatprep.mubr.bf16.mxu0 0
        %1799 = vmatmul.mubr.bf16.gmra.mrb[0].mxu0 %v1638
        %v1800 = vpop.f32.mrb[0].mxu0
        %v1801 = vadd.f32 %v1660, %v1800
        %v1802 = vpop.f32.mrb[0].mxu0
        %v1803 = vpop.f32.mrb[0].mxu0
        %v1804 = vadd.f32 %v1660, %v1803
        %v1805 = vpop.f32.mrb[0].mxu0
        %1806 = vdwg.mxu0
        %1807 = vst [vmem:[%s313] sm:$0xff] %v1745
        %1808 = vst [vmem:[%s313 + $0x8] sm:$0xff] %v1748
        %1809 = vst [vmem:[%s313 + $0x10] sm:$0xff] %v1753
        %1810 = vst [vmem:[%s313 + $0x18] sm:$0xff] %v1756
        %1811 = vst [vmem:[%s313 + $0x20] sm:$0xff] %v1761
        %1812 = vst [vmem:[%s313 + $0x28] sm:$0xff] %v1764
        %1813 = vst [vmem:[%s313 + $0x30] sm:$0xff] %v1769
        %1814 = vst [vmem:[%s313 + $0x38] sm:$0xff] %v1772
        %1815 = vst [vmem:[%s313 + $0x40] sm:$0xff] %v1777
        %1816 = vst [vmem:[%s313 + $0x48] sm:$0xff] %v1780
        %1817 = vst [vmem:[%s313 + $0x50] sm:$0xff] %v1785
        %1818 = vst [vmem:[%s313 + $0x58] sm:$0xff] %v1788
        %1819 = vst [vmem:[%s313 + $0x60] sm:$0xff] %v1793
        %1820 = vst [vmem:[%s313 + $0x68] sm:$0xff] %v1796
        %1821 = vst [vmem:[%s313 + $0x70] sm:$0xff] %v1801
        %1822 = vst [vmem:[%s313 + $0x78] sm:$0xff] %v1804
        %s1823 = sand.u32 %s158, 1
        %s1824 = scalar_lea.sflag [#allocation5], %s1823
        %s1825 = sand.u32 %s158, 1
        %s1826 = smul.addr %s1825, 128
        %s1827 = scalar_lea.vmem [#allocation14], %s1826
        // Predicated region
        $region69: #{tpu_custom_call.1} parent=43 // pred_check
          %p1828 = pneg %p168
        $region70: #{tpu_custom_call.1} parent=43 // pred_check_branch
          %1830 = sbr.rel (%p1828) target = $region72
        $region71: #{tpu_custom_call.1} parent=43 // pred_region
          %s1831 = smul.u32 16, %s24
          %s1833 = ssub.s32 2048, 2048
          %1834 = vsyncadd %s1824, %s1833
          %s1835 = smul.addr %s1831, 128
          %s1836 = scalar_lea.hbm %s6, %s1835
          %s1837 = sshll.u32 %s1827, 4
          %s1838 = int_to_ptr.vmem [resolvable:$true] %s1837
          %1843 = dma.vmem_to_hbm [thread:$0]  %s1838, 2048, %s1836, %s1824, 128, 128, 8
        $region72: #{tpu_custom_call.1} parent=43 // pred_fallthru
          _
      $region44: #{tpu_custom_call.1} parent=5 // pred_fallthru
        _
      %p1844 = scmp.le.s32.totalorder 2, %s19
      // Predicated region
      $region73: #{tpu_custom_call.1} parent=5 // pred_check
        %p1845 = pneg %p1844
      $region74: #{tpu_custom_call.1} parent=5 // pred_check_branch
        %1847 = sbr.rel (%p1845) target = $region76
      $region75: #{tpu_custom_call.1} parent=5 // pred_region
        %s1848 = ssub.s32 %s19, 2
        // Predicated region
        $region77: #{tpu_custom_call.1} parent=75 // pred_check
          %p1849 = pneg %p174
        $region78: #{tpu_custom_call.1} parent=75 // pred_check_branch
          %1851 = sbr.rel (%p1849) target = $region80
        $region79: #{tpu_custom_call.1} parent=75 // pred_region
          %s1852 = sand.u32 %s159, 1
          %s1853 = scalar_lea.sflag [#allocation5], %s1852
          %s1854 = sand.u32 %s159, 1
          %s1855 = smul.addr %s1854, 128
          %s1856 = scalar_lea.vmem [#allocation14], %s1855
          %1857 = dma.done %s1853, 2048
        $region80: #{tpu_custom_call.1} parent=75 // pred_fallthru
          _
      $region76: #{tpu_custom_call.1} parent=5 // pred_fallthru
        _
    $region6: #{tpu_custom_call.1} parent=1 // loop_footer
      %s23 = sadd.s32 1, %s19
    $region7: #{tpu_custom_call.1} parent=1 // loop_footer_branch
      %18 = sbr.rel target = $region3
    $region8: #{tpu_custom_call.1} parent=1 // loop_exit
      _
    %1858 = vsyncpa [#allocation4], 1
    %s1859 = scalar_lea.sflag [#allocation4], 1
    %1860 = vsyncpa %s1859, 1
    %1861 = vsyncpa [#allocation7], 1
    %1862 = vsyncpa [#allocation10], 1
    %1863 = vsyncpa [#allocation13], 1
    %1864 = vsyncpa [#allocation5], 1
    %s1865 = scalar_lea.sflag [#allocation5], 1
    %1866 = vsyncpa %s1865, 1

</llo_original>
